<compile_context>
chip_gen: v5e
topology: v5e:2x2
jax: 0.10.0
libtpu: 0.0.40
codegen_flags: <defaults>
</compile_context>

<pallas_src>
import functools

import jax
import jax.numpy as jnp
from jax import lax
from jax.experimental import pallas as pl
from jax.experimental.pallas import tpu as pltpu


# -----------------------------------------------------------------------------
# Kernel
# -----------------------------------------------------------------------------
def _qst_encoder_kernel(num_layers, hidden_size, batch, bp,
                        ids_ref, w2v_ref, *refs):
    """refs = [w_ih0_T, w_hh0_T, b0,
               (w_ih_l_T, w_hh_l_T, b_l) for l in 1..num_layers-1,
               fc_w_T, fc_b, out_ref]"""
    H = hidden_size
    BP = bp                              # sublane-padded batch (multiple of 8)
    SBP = ids_ref.shape[0]               # S * BP
    S = SBP // BP
    V = w2v_ref.shape[0]                 # padded vocab

    # ---- hoist every weight/bias load out of the recurrence (vreg-resident) --
    w_ih0 = refs[0][...]                 # (E, 4H)  bf16
    w_hh0 = refs[1][...]                 # (H, 4H)  bf16
    b0 = refs[2][...]                    # (1, 4H)  f32  (= b_ih0 + b_hh0)
    pos = 3
    layer_w = []
    for _ in range(1, num_layers):
        w_ih_l = refs[pos][...]          # (H, 4H) bf16
        w_hh_l = refs[pos + 1][...]      # (H, 4H) bf16
        # Broadcast the bias ONCE here so no broadcast_in_dim sits in the loop.
        b_l = jnp.broadcast_to(refs[pos + 2][...], (BP, 4 * H))
        layer_w.append((w_ih_l, w_hh_l, b_l))
        pos += 3
    fc_w = refs[pos][...]                # (2*L*H, embed) bf16
    fc_b = refs[pos + 1][...]            # (1, embed)     f32
    out_ref = refs[pos + 2]

    cdt = w_ih0.dtype                    # bf16 matmul-operand dtype

    # ---- prologue: in-kernel one-hot gather, tanh, layer-0 input projection --
    ids = ids_ref[...]                                               # (S*BP, 1)
    onehot = (lax.broadcasted_iota(jnp.int32, (SBP, V), 1) == ids
              ).astype(jnp.float32)                                  # exact 0/1
    emb = jnp.dot(onehot, w2v_ref[...],
                  preferred_element_type=jnp.float32)                # (S*BP, E)
    xt = jnp.tanh(emb)
    x_proj = jnp.dot(xt.astype(cdt), w_ih0,
                     preferred_element_type=jnp.float32) + b0        # (S*BP, 4H)

    # ---- hoisted gate-activation constants (single-tanh trick) ---------------
    # sigmoid(x) = 0.5 * (1 + tanh(x/2)); gate order is PyTorch's [i | f | g | o].
    lane = lax.broadcasted_iota(jnp.int32, (BP, 4 * H), 1)
    g_mask = (lane >= 2 * H) & (lane < 3 * H)
    gate_scale = jnp.where(g_mask, 1.0, 0.5).astype(jnp.float32)     # (BP, 4H)
    gate_off = jnp.where(g_mask, 0.0, 0.5).astype(jnp.float32)       # (BP, 4H)

    def lstm_combine(gates, c_prev):
        # One full-width tanh (EUP) + one mul + one fma-style fixup (VPU).
        y = jnp.tanh(gates * gate_scale)
        act = y * gate_scale + gate_off
        i = act[:, 0:H]
        f = act[:, H:2 * H]
        g = act[:, 2 * H:3 * H]
        o = act[:, 3 * H:4 * H]
        c_new = f * c_prev + i * g
        h_new = o * jnp.tanh(c_new)
        return h_new, c_new

    hs = [jnp.zeros((BP, H), jnp.float32) for _ in range(num_layers)]
    cs = [jnp.zeros((BP, H), jnp.float32) for _ in range(num_layers)]

    # ---- fully (statically) unrolled recurrence ------------------------------
    # (for larger S*num_layers, switch to lax.fori_loop(..., unroll=k))
    for t in range(S):
        # layer 0: input projection hoisted -> only the recurrent matmul.
        # x_proj slice starts at a sublane (vreg) boundary: t*BP, BP multiple of 8.
        gates0 = x_proj[t * BP:(t + 1) * BP, :] + jnp.dot(
            hs[0].astype(cdt), w_hh0, preferred_element_type=jnp.float32)
        hs[0], cs[0] = lstm_combine(gates0, cs[0])

        # layers >= 1: two independent tiny dots summed in f32 (no lane concat).
        for l in range(1, num_layers):
            w_ih_l, w_hh_l, b_l = layer_w[l - 1]
            gates_l = (
                jnp.dot(hs[l - 1].astype(cdt), w_ih_l,
                        preferred_element_type=jnp.float32)
                + jnp.dot(hs[l].astype(cdt), w_hh_l,
                          preferred_element_type=jnp.float32)
                + b_l)
            hs[l], cs[l] = lstm_combine(gates_l, cs[l])

    # torch.cat((hidden, cell), 2).transpose(0,1).reshape(B, -1)
    #   == per-layer [h_l || c_l] concatenated over layers (once, off the loop).
    parts = []
    for l in range(num_layers):
        parts.append(hs[l])
        parts.append(cs[l])
    feat = jnp.tanh(jnp.concatenate(parts, axis=-1))                  # (BP, 2*L*H)
    out = jnp.dot(feat.astype(cdt), fc_w,
                  preferred_element_type=jnp.float32) + fc_b          # (BP, embed)
    # Drop the sublane-padding rows; (B, 32) masked store is negligible here.
    out_ref[...] = out[:batch].astype(out_ref.dtype)


# -----------------------------------------------------------------------------
# Wrapper
# -----------------------------------------------------------------------------
def qst_encoder_forward(question, params, *, num_layers, hidden_size, embed_size):
    """question: (batch, seq_len) int32 token ids."""
    batch, seq_len = question.shape
    w_dtype = jnp.bfloat16          # MXU-operand dtype (f32 accumulation inside)
    BP = ((batch + 7) // 8) * 8     # sublane-padded internal batch

    # Only remaining glue: time-major, sublane-padded int32 token ids.
    # (replaces the old f32 gather + transpose + reshape + cast producer chain)
    ids = jnp.pad(question.T.astype(jnp.int32), ((0, 0), (0, BP - batch)))
    ids = ids.reshape(seq_len * BP, 1)                                # (S*BP, 1)

    # Embedding table, vocab padded to a sublane multiple; kept f32 so the
    # in-kernel one-hot matmul reproduces the gather exactly.
    w2v = jnp.asarray(params["word2vec"], jnp.float32)
    vpad = (-w2v.shape[0]) % 8
    w2v = jnp.pad(w2v, ((0, vpad), (0, 0)))                           # (Vpad, E)

    inputs = [ids, w2v]
    # layer 0: w_ih / w_hh separate (input projection hoisted over time).
    inputs.append(jnp.asarray(params["w_ih_0"]).T.astype(w_dtype))              # (E, 4H)
    inputs.append(jnp.asarray(params["w_hh_0"]).T.astype(w_dtype))              # (H, 4H)
    inputs.append((params["b_ih_0"] + params["b_hh_0"])[None, :]
                  .astype(jnp.float32))                                         # (1, 4H)
    # layers >= 1: keep w_ih / w_hh separate too (two dots, no per-step concat).
    for l in range(1, num_layers):
        inputs.append(jnp.asarray(params[f"w_ih_{l}"]).T.astype(w_dtype))       # (H, 4H)
        inputs.append(jnp.asarray(params[f"w_hh_{l}"]).T.astype(w_dtype))       # (H, 4H)
        inputs.append((params[f"b_ih_{l}"] + params[f"b_hh_{l}"])[None, :]
                      .astype(jnp.float32))                                     # (1, 4H)
    inputs.append(jnp.asarray(params["fc_w"]).T.astype(w_dtype))                # (2LH, embed)
    inputs.append(params["fc_b"][None, :].astype(jnp.float32))                  # (1, embed)

    kernel = functools.partial(_qst_encoder_kernel,
                               num_layers, hidden_size, batch, BP)
    # Gridless single invocation: total VMEM footprint < 100 KiB on every gen.
    # If batch ever grows, add a grid over batch with
    # compiler_params=pltpu.CompilerParams(dimension_semantics=("parallel",))
    # to engage v7x's second TensorCore.
    out = pl.pallas_call(
        kernel,
        out_shape=jax.ShapeDtypeStruct((batch, embed_size), jnp.float32),
        in_specs=[pl.BlockSpec(memory_space=pltpu.MemorySpace.VMEM)] * len(inputs),
        out_specs=pl.BlockSpec(memory_space=pltpu.MemorySpace.VMEM),
    )(*inputs)
    return out


# -----------------------------------------------------------------------------
# Pure-JAX reference (f32, for correctness check)
# -----------------------------------------------------------------------------
def qst_encoder_reference(question, params, *, num_layers, hidden_size, embed_size):
    batch, seq_len = question.shape
    H = hidden_size
    emb = jnp.tanh(jnp.take(params["word2vec"], question, axis=0))   # (B, S, E)
    x = jnp.transpose(emb, (1, 0, 2))                                # (S, B, E)

    hs = [jnp.zeros((batch, H), jnp.float32) for _ in range(num_layers)]
    cs = [jnp.zeros((batch, H), jnp.float32) for _ in range(num_layers)]
    for t in range(seq_len):
        inp = x[t]
        for l in range(num_layers):
            gates = (
                inp @ params[f"w_ih_{l}"].T
                + hs[l] @ params[f"w_hh_{l}"].T
                + params[f"b_ih_{l}"]
                + params[f"b_hh_{l}"]
            )
            i = jax.nn.sigmoid(gates[:, 0:H])
            f = jax.nn.sigmoid(gates[:, H:2 * H])
            g = jnp.tanh(gates[:, 2 * H:3 * H])
            o = jax.nn.sigmoid(gates[:, 3 * H:4 * H])
            cs[l] = f * cs[l] + i * g
            hs[l] = o * jnp.tanh(cs[l])
            inp = hs[l]
    feat = jnp.concatenate(
        [jnp.concatenate([hs[l], cs[l]], axis=-1) for l in range(num_layers)], axis=-1
    )
    feat = jnp.tanh(feat)
    return feat @ params["fc_w"].T + params["fc_b"]


# -----------------------------------------------------------------------------
# Main
# -----------------------------------------------------------------------------
if __name__ == "__main__":
    # Module hyperparameters (small, consistent with the forward pass).
    qst_vocab_size = 50
    word_embed_size = 32
    embed_size = 32
    num_layers = 2
    hidden_size = 32
    batch, seq_len = 2, 8

    key = jax.random.PRNGKey(0)
    keys = jax.random.split(key, 16)

    def init(k, shape, scale=0.1):
        return (scale * jax.random.normal(k, shape)).astype(jnp.float32)

    params = {"word2vec": init(keys[0], (qst_vocab_size, word_embed_size))}
    ki = 1
    for l in range(num_layers):
        in_dim = word_embed_size if l == 0 else hidden_size
        params[f"w_ih_{l}"] = init(keys[ki], (4 * hidden_size, in_dim)); ki += 1
        params[f"w_hh_{l}"] = init(keys[ki], (4 * hidden_size, hidden_size)); ki += 1
        params[f"b_ih_{l}"] = init(keys[ki], (4 * hidden_size,)); ki += 1
        params[f"b_hh_{l}"] = init(keys[ki], (4 * hidden_size,)); ki += 1
    params["fc_w"] = init(keys[ki], (embed_size, 2 * num_layers * hidden_size)); ki += 1
    params["fc_b"] = init(keys[ki], (embed_size,)); ki += 1

    question = jax.random.randint(
        keys[15], (batch, seq_len), 0, qst_vocab_size, dtype=jnp.int32
    )

    out = qst_encoder_forward(
        question, params,
        num_layers=num_layers, hidden_size=hidden_size, embed_size=embed_size,
    )
    out = jax.block_until_ready(out)

    ref = qst_encoder_reference(
        question, params,
        num_layers=num_layers, hidden_size=hidden_size, embed_size=embed_size,
    )
    assert out.shape == (batch, embed_size)
    # Tolerance accounts for bf16 matmul operands (f32 accumulation).
    assert jnp.allclose(out, ref, atol=2e-2, rtol=2e-2), "mismatch vs reference"

    print("KERNEL_OK")
</pallas_src>

<mosaic_0001>
module attributes {stable_mosaic.version = 11 : i64} {
  func.func @_qst_encoder_kernel(%arg0: memref<64x1xi32, #tpu.memory_space<vmem>>, %arg1: memref<56x32xf32, #tpu.memory_space<vmem>>, %arg2: memref<32x128xbf16, #tpu.memory_space<vmem>>, %arg3: memref<32x128xbf16, #tpu.memory_space<vmem>>, %arg4: memref<1x128xf32, #tpu.memory_space<vmem>>, %arg5: memref<32x128xbf16, #tpu.memory_space<vmem>>, %arg6: memref<32x128xbf16, #tpu.memory_space<vmem>>, %arg7: memref<1x128xf32, #tpu.memory_space<vmem>>, %arg8: memref<128x32xbf16, #tpu.memory_space<vmem>>, %arg9: memref<1x32xf32, #tpu.memory_space<vmem>>, %arg10: memref<2x32xf32, #tpu.memory_space<vmem>>) attributes {dimension_semantics = [], scalar_prefetch = 0 : i64, scratch_operands = 0 : i64, tpu.core_type = #tpu.core_type<tc>} {
    %c0 = arith.constant 0 : index
    %c0_0 = arith.constant 0 : index
    %0 = vector.load %arg2[%c0, %c0_0] : memref<32x128xbf16, #tpu.memory_space<vmem>>, vector<32x128xbf16>
    %c0_1 = arith.constant 0 : index
    %c0_2 = arith.constant 0 : index
    %1 = vector.load %arg3[%c0_1, %c0_2] : memref<32x128xbf16, #tpu.memory_space<vmem>>, vector<32x128xbf16>
    %c0_3 = arith.constant 0 : index
    %c0_4 = arith.constant 0 : index
    %2 = vector.load %arg4[%c0_3, %c0_4] : memref<1x128xf32, #tpu.memory_space<vmem>>, vector<1x128xf32>
    %c0_5 = arith.constant 0 : index
    %c0_6 = arith.constant 0 : index
    %3 = vector.load %arg5[%c0_5, %c0_6] : memref<32x128xbf16, #tpu.memory_space<vmem>>, vector<32x128xbf16>
    %c0_7 = arith.constant 0 : index
    %c0_8 = arith.constant 0 : index
    %4 = vector.load %arg6[%c0_7, %c0_8] : memref<32x128xbf16, #tpu.memory_space<vmem>>, vector<32x128xbf16>
    %c0_9 = arith.constant 0 : index
    %c0_10 = arith.constant 0 : index
    %5 = vector.load %arg7[%c0_9, %c0_10] : memref<1x128xf32, #tpu.memory_space<vmem>>, vector<1x128xf32>
    %6 = vector.shape_cast %5 : vector<1x128xf32> to vector<1x128xf32>
    %7 = vector.broadcast %6 : vector<1x128xf32> to vector<8x128xf32>
    %c0_11 = arith.constant 0 : index
    %c0_12 = arith.constant 0 : index
    %8 = vector.load %arg8[%c0_11, %c0_12] : memref<128x32xbf16, #tpu.memory_space<vmem>>, vector<128x32xbf16>
    %c0_13 = arith.constant 0 : index
    %c0_14 = arith.constant 0 : index
    %9 = vector.load %arg9[%c0_13, %c0_14] : memref<1x32xf32, #tpu.memory_space<vmem>>, vector<1x32xf32>
    %c0_15 = arith.constant 0 : index
    %c0_16 = arith.constant 0 : index
    %10 = vector.load %arg0[%c0_15, %c0_16] : memref<64x1xi32, #tpu.memory_space<vmem>>, vector<64x1xi32>
    %11 = tpu.iota {dimensions = array<i32: 1>} : vector<64x56xi32>
    %12 = vector.broadcast %10 : vector<64x1xi32> to vector<64x56xi32>
    %13 = arith.cmpi eq, %11, %12 : vector<64x56xi32>
    %14 = arith.extui %13 : vector<64x56xi1> to vector<64x56xi32>
    %15 = arith.sitofp %14 : vector<64x56xi32> to vector<64x56xf32>
    %c0_17 = arith.constant 0 : index
    %c0_18 = arith.constant 0 : index
    %16 = vector.load %arg1[%c0_17, %c0_18] : memref<56x32xf32, #tpu.memory_space<vmem>>, vector<56x32xf32>
    %cst = arith.constant dense<0.000000e+00> : vector<64x32xf32>
    %17 = tpu.matmul %15, %16, %cst {dimension_numbers = #tpu.dot_dimension_numbers<[1], [0], [0], [1], [0, 0, 1, 1], [], []>} : vector<64x56xf32>, vector<56x32xf32>, vector<64x32xf32> -> vector<64x32xf32>
    %18 = math.tanh %17 : vector<64x32xf32>
    %19 = arith.truncf %18 : vector<64x32xf32> to vector<64x32xbf16>
    %cst_19 = arith.constant dense<0.000000e+00> : vector<64x128xf32>
    %20 = tpu.matmul %19, %0, %cst_19 {dimension_numbers = #tpu.dot_dimension_numbers<[1], [0], [0], [1], [0, 0, 1, 1], [], []>} : vector<64x32xbf16>, vector<32x128xbf16>, vector<64x128xf32> -> vector<64x128xf32>
    %21 = vector.broadcast %2 : vector<1x128xf32> to vector<64x128xf32>
    %22 = arith.addf %20, %21 : vector<64x128xf32>
    %23 = tpu.iota {dimensions = array<i32: 1>} : vector<8x128xi32>
    %c64_i32 = arith.constant 64 : i32
    %24 = vector.broadcast %c64_i32 : i32 to vector<8x128xi32>
    %25 = arith.cmpi sge, %23, %24 : vector<8x128xi32>
    %c96_i32 = arith.constant 96 : i32
    %26 = vector.broadcast %c96_i32 : i32 to vector<8x128xi32>
    %27 = arith.cmpi slt, %23, %26 : vector<8x128xi32>
    %28 = arith.andi %25, %27 : vector<8x128xi1>
    %cst_20 = arith.constant 1.000000e+00 : f32
    %cst_21 = arith.constant 5.000000e-01 : f32
    %29 = vector.broadcast %cst_20 : f32 to vector<8x128xf32>
    %30 = vector.broadcast %cst_21 : f32 to vector<8x128xf32>
    %31 = arith.select %28, %29, %30 : vector<8x128xi1>, vector<8x128xf32>
    %cst_22 = arith.constant 0.000000e+00 : f32
    %cst_23 = arith.constant 5.000000e-01 : f32
    %32 = vector.broadcast %cst_22 : f32 to vector<8x128xf32>
    %33 = vector.broadcast %cst_23 : f32 to vector<8x128xf32>
    %34 = arith.select %28, %32, %33 : vector<8x128xi1>, vector<8x128xf32>
    %cst_24 = arith.constant 0.000000e+00 : f32
    %35 = vector.broadcast %cst_24 : f32 to vector<8x32xf32>
    %cst_25 = arith.constant 0.000000e+00 : f32
    %36 = vector.broadcast %cst_25 : f32 to vector<8x32xf32>
    %cst_26 = arith.constant 0.000000e+00 : f32
    %37 = vector.broadcast %cst_26 : f32 to vector<8x32xf32>
    %cst_27 = arith.constant 0.000000e+00 : f32
    %38 = vector.broadcast %cst_27 : f32 to vector<8x32xf32>
    %39 = vector.extract_strided_slice %22 {offsets = [0, 0], sizes = [8, 128], strides = [1, 1]} : vector<64x128xf32> to vector<8x128xf32>
    %40 = arith.truncf %35 : vector<8x32xf32> to vector<8x32xbf16>
    %cst_28 = arith.constant dense<0.000000e+00> : vector<8x128xf32>
    %41 = tpu.matmul %40, %1, %cst_28 {dimension_numbers = #tpu.dot_dimension_numbers<[1], [0], [0], [1], [0, 0, 1, 1], [], []>} : vector<8x32xbf16>, vector<32x128xbf16>, vector<8x128xf32> -> vector<8x128xf32>
    %42 = arith.addf %39, %41 : vector<8x128xf32>
    %43 = arith.mulf %42, %31 : vector<8x128xf32>
    %44 = math.tanh %43 : vector<8x128xf32>
    %45 = arith.mulf %44, %31 : vector<8x128xf32>
    %46 = arith.addf %45, %34 : vector<8x128xf32>
    %47 = vector.extract_strided_slice %46 {offsets = [0, 0], sizes = [8, 32], strides = [1, 1]} : vector<8x128xf32> to vector<8x32xf32>
    %48 = vector.extract_strided_slice %46 {offsets = [0, 32], sizes = [8, 32], strides = [1, 1]} : vector<8x128xf32> to vector<8x32xf32>
    %49 = vector.extract_strided_slice %46 {offsets = [0, 64], sizes = [8, 32], strides = [1, 1]} : vector<8x128xf32> to vector<8x32xf32>
    %50 = vector.extract_strided_slice %46 {offsets = [0, 96], sizes = [8, 32], strides = [1, 1]} : vector<8x128xf32> to vector<8x32xf32>
    %51 = arith.mulf %48, %37 : vector<8x32xf32>
    %52 = arith.mulf %47, %49 : vector<8x32xf32>
    %53 = arith.addf %51, %52 : vector<8x32xf32>
    %54 = math.tanh %53 : vector<8x32xf32>
    %55 = arith.mulf %50, %54 : vector<8x32xf32>
    %56 = arith.truncf %55 : vector<8x32xf32> to vector<8x32xbf16>
    %cst_29 = arith.constant dense<0.000000e+00> : vector<8x128xf32>
    %57 = tpu.matmul %56, %3, %cst_29 {dimension_numbers = #tpu.dot_dimension_numbers<[1], [0], [0], [1], [0, 0, 1, 1], [], []>} : vector<8x32xbf16>, vector<32x128xbf16>, vector<8x128xf32> -> vector<8x128xf32>
    %58 = arith.truncf %36 : vector<8x32xf32> to vector<8x32xbf16>
    %cst_30 = arith.constant dense<0.000000e+00> : vector<8x128xf32>
    %59 = tpu.matmul %58, %4, %cst_30 {dimension_numbers = #tpu.dot_dimension_numbers<[1], [0], [0], [1], [0, 0, 1, 1], [], []>} : vector<8x32xbf16>, vector<32x128xbf16>, vector<8x128xf32> -> vector<8x128xf32>
    %60 = arith.addf %57, %59 : vector<8x128xf32>
    %61 = arith.addf %60, %7 : vector<8x128xf32>
    %62 = arith.mulf %61, %31 : vector<8x128xf32>
    %63 = math.tanh %62 : vector<8x128xf32>
    %64 = arith.mulf %63, %31 : vector<8x128xf32>
    %65 = arith.addf %64, %34 : vector<8x128xf32>
    %66 = vector.extract_strided_slice %65 {offsets = [0, 0], sizes = [8, 32], strides = [1, 1]} : vector<8x128xf32> to vector<8x32xf32>
    %67 = vector.extract_strided_slice %65 {offsets = [0, 32], sizes = [8, 32], strides = [1, 1]} : vector<8x128xf32> to vector<8x32xf32>
    %68 = vector.extract_strided_slice %65 {offsets = [0, 64], sizes = [8, 32], strides = [1, 1]} : vector<8x128xf32> to vector<8x32xf32>
    %69 = vector.extract_strided_slice %65 {offsets = [0, 96], sizes = [8, 32], strides = [1, 1]} : vector<8x128xf32> to vector<8x32xf32>
    %70 = arith.mulf %67, %38 : vector<8x32xf32>
    %71 = arith.mulf %66, %68 : vector<8x32xf32>
    %72 = arith.addf %70, %71 : vector<8x32xf32>
    %73 = math.tanh %72 : vector<8x32xf32>
    %74 = arith.mulf %69, %73 : vector<8x32xf32>
    %75 = vector.extract_strided_slice %22 {offsets = [8, 0], sizes = [8, 128], strides = [1, 1]} : vector<64x128xf32> to vector<8x128xf32>
    %76 = arith.truncf %55 : vector<8x32xf32> to vector<8x32xbf16>
    %cst_31 = arith.constant dense<0.000000e+00> : vector<8x128xf32>
    %77 = tpu.matmul %76, %1, %cst_31 {dimension_numbers = #tpu.dot_dimension_numbers<[1], [0], [0], [1], [0, 0, 1, 1], [], []>} : vector<8x32xbf16>, vector<32x128xbf16>, vector<8x128xf32> -> vector<8x128xf32>
    %78 = arith.addf %75, %77 : vector<8x128xf32>
    %79 = arith.mulf %78, %31 : vector<8x128xf32>
    %80 = math.tanh %79 : vector<8x128xf32>
    %81 = arith.mulf %80, %31 : vector<8x128xf32>
    %82 = arith.addf %81, %34 : vector<8x128xf32>
    %83 = vector.extract_strided_slice %82 {offsets = [0, 0], sizes = [8, 32], strides = [1, 1]} : vector<8x128xf32> to vector<8x32xf32>
    %84 = vector.extract_strided_slice %82 {offsets = [0, 32], sizes = [8, 32], strides = [1, 1]} : vector<8x128xf32> to vector<8x32xf32>
    %85 = vector.extract_strided_slice %82 {offsets = [0, 64], sizes = [8, 32], strides = [1, 1]} : vector<8x128xf32> to vector<8x32xf32>
    %86 = vector.extract_strided_slice %82 {offsets = [0, 96], sizes = [8, 32], strides = [1, 1]} : vector<8x128xf32> to vector<8x32xf32>
    %87 = arith.mulf %84, %53 : vector<8x32xf32>
    %88 = arith.mulf %83, %85 : vector<8x32xf32>
    %89 = arith.addf %87, %88 : vector<8x32xf32>
    %90 = math.tanh %89 : vector<8x32xf32>
    %91 = arith.mulf %86, %90 : vector<8x32xf32>
    %92 = arith.truncf %91 : vector<8x32xf32> to vector<8x32xbf16>
    %cst_32 = arith.constant dense<0.000000e+00> : vector<8x128xf32>
    %93 = tpu.matmul %92, %3, %cst_32 {dimension_numbers = #tpu.dot_dimension_numbers<[1], [0], [0], [1], [0, 0, 1, 1], [], []>} : vector<8x32xbf16>, vector<32x128xbf16>, vector<8x128xf32> -> vector<8x128xf32>
    %94 = arith.truncf %74 : vector<8x32xf32> to vector<8x32xbf16>
    %cst_33 = arith.constant dense<0.000000e+00> : vector<8x128xf32>
    %95 = tpu.matmul %94, %4, %cst_33 {dimension_numbers = #tpu.dot_dimension_numbers<[1], [0], [0], [1], [0, 0, 1, 1], [], []>} : vector<8x32xbf16>, vector<32x128xbf16>, vector<8x128xf32> -> vector<8x128xf32>
    %96 = arith.addf %93, %95 : vector<8x128xf32>
    %97 = arith.addf %96, %7 : vector<8x128xf32>
    %98 = arith.mulf %97, %31 : vector<8x128xf32>
    %99 = math.tanh %98 : vector<8x128xf32>
    %100 = arith.mulf %99, %31 : vector<8x128xf32>
    %101 = arith.addf %100, %34 : vector<8x128xf32>
    %102 = vector.extract_strided_slice %101 {offsets = [0, 0], sizes = [8, 32], strides = [1, 1]} : vector<8x128xf32> to vector<8x32xf32>
    %103 = vector.extract_strided_slice %101 {offsets = [0, 32], sizes = [8, 32], strides = [1, 1]} : vector<8x128xf32> to vector<8x32xf32>
    %104 = vector.extract_strided_slice %101 {offsets = [0, 64], sizes = [8, 32], strides = [1, 1]} : vector<8x128xf32> to vector<8x32xf32>
    %105 = vector.extract_strided_slice %101 {offsets = [0, 96], sizes = [8, 32], strides = [1, 1]} : vector<8x128xf32> to vector<8x32xf32>
    %106 = arith.mulf %103, %72 : vector<8x32xf32>
    %107 = arith.mulf %102, %104 : vector<8x32xf32>
    %108 = arith.addf %106, %107 : vector<8x32xf32>
    %109 = math.tanh %108 : vector<8x32xf32>
    %110 = arith.mulf %105, %109 : vector<8x32xf32>
    %111 = vector.extract_strided_slice %22 {offsets = [16, 0], sizes = [8, 128], strides = [1, 1]} : vector<64x128xf32> to vector<8x128xf32>
    %112 = arith.truncf %91 : vector<8x32xf32> to vector<8x32xbf16>
    %cst_34 = arith.constant dense<0.000000e+00> : vector<8x128xf32>
    %113 = tpu.matmul %112, %1, %cst_34 {dimension_numbers = #tpu.dot_dimension_numbers<[1], [0], [0], [1], [0, 0, 1, 1], [], []>} : vector<8x32xbf16>, vector<32x128xbf16>, vector<8x128xf32> -> vector<8x128xf32>
    %114 = arith.addf %111, %113 : vector<8x128xf32>
    %115 = arith.mulf %114, %31 : vector<8x128xf32>
    %116 = math.tanh %115 : vector<8x128xf32>
    %117 = arith.mulf %116, %31 : vector<8x128xf32>
    %118 = arith.addf %117, %34 : vector<8x128xf32>
    %119 = vector.extract_strided_slice %118 {offsets = [0, 0], sizes = [8, 32], strides = [1, 1]} : vector<8x128xf32> to vector<8x32xf32>
    %120 = vector.extract_strided_slice %118 {offsets = [0, 32], sizes = [8, 32], strides = [1, 1]} : vector<8x128xf32> to vector<8x32xf32>
    %121 = vector.extract_strided_slice %118 {offsets = [0, 64], sizes = [8, 32], strides = [1, 1]} : vector<8x128xf32> to vector<8x32xf32>
    %122 = vector.extract_strided_slice %118 {offsets = [0, 96], sizes = [8, 32], strides = [1, 1]} : vector<8x128xf32> to vector<8x32xf32>
    %123 = arith.mulf %120, %89 : vector<8x32xf32>
    %124 = arith.mulf %119, %121 : vector<8x32xf32>
    %125 = arith.addf %123, %124 : vector<8x32xf32>
    %126 = math.tanh %125 : vector<8x32xf32>
    %127 = arith.mulf %122, %126 : vector<8x32xf32>
    %128 = arith.truncf %127 : vector<8x32xf32> to vector<8x32xbf16>
    %cst_35 = arith.constant dense<0.000000e+00> : vector<8x128xf32>
    %129 = tpu.matmul %128, %3, %cst_35 {dimension_numbers = #tpu.dot_dimension_numbers<[1], [0], [0], [1], [0, 0, 1, 1], [], []>} : vector<8x32xbf16>, vector<32x128xbf16>, vector<8x128xf32> -> vector<8x128xf32>
    %130 = arith.truncf %110 : vector<8x32xf32> to vector<8x32xbf16>
    %cst_36 = arith.constant dense<0.000000e+00> : vector<8x128xf32>
    %131 = tpu.matmul %130, %4, %cst_36 {dimension_numbers = #tpu.dot_dimension_numbers<[1], [0], [0], [1], [0, 0, 1, 1], [], []>} : vector<8x32xbf16>, vector<32x128xbf16>, vector<8x128xf32> -> vector<8x128xf32>
    %132 = arith.addf %129, %131 : vector<8x128xf32>
    %133 = arith.addf %132, %7 : vector<8x128xf32>
    %134 = arith.mulf %133, %31 : vector<8x128xf32>
    %135 = math.tanh %134 : vector<8x128xf32>
    %136 = arith.mulf %135, %31 : vector<8x128xf32>
    %137 = arith.addf %136, %34 : vector<8x128xf32>
    %138 = vector.extract_strided_slice %137 {offsets = [0, 0], sizes = [8, 32], strides = [1, 1]} : vector<8x128xf32> to vector<8x32xf32>
    %139 = vector.extract_strided_slice %137 {offsets = [0, 32], sizes = [8, 32], strides = [1, 1]} : vector<8x128xf32> to vector<8x32xf32>
    %140 = vector.extract_strided_slice %137 {offsets = [0, 64], sizes = [8, 32], strides = [1, 1]} : vector<8x128xf32> to vector<8x32xf32>
    %141 = vector.extract_strided_slice %137 {offsets = [0, 96], sizes = [8, 32], strides = [1, 1]} : vector<8x128xf32> to vector<8x32xf32>
    %142 = arith.mulf %139, %108 : vector<8x32xf32>
    %143 = arith.mulf %138, %140 : vector<8x32xf32>
    %144 = arith.addf %142, %143 : vector<8x32xf32>
    %145 = math.tanh %144 : vector<8x32xf32>
    %146 = arith.mulf %141, %145 : vector<8x32xf32>
    %147 = vector.extract_strided_slice %22 {offsets = [24, 0], sizes = [8, 128], strides = [1, 1]} : vector<64x128xf32> to vector<8x128xf32>
    %148 = arith.truncf %127 : vector<8x32xf32> to vector<8x32xbf16>
    %cst_37 = arith.constant dense<0.000000e+00> : vector<8x128xf32>
    %149 = tpu.matmul %148, %1, %cst_37 {dimension_numbers = #tpu.dot_dimension_numbers<[1], [0], [0], [1], [0, 0, 1, 1], [], []>} : vector<8x32xbf16>, vector<32x128xbf16>, vector<8x128xf32> -> vector<8x128xf32>
    %150 = arith.addf %147, %149 : vector<8x128xf32>
    %151 = arith.mulf %150, %31 : vector<8x128xf32>
    %152 = math.tanh %151 : vector<8x128xf32>
    %153 = arith.mulf %152, %31 : vector<8x128xf32>
    %154 = arith.addf %153, %34 : vector<8x128xf32>
    %155 = vector.extract_strided_slice %154 {offsets = [0, 0], sizes = [8, 32], strides = [1, 1]} : vector<8x128xf32> to vector<8x32xf32>
    %156 = vector.extract_strided_slice %154 {offsets = [0, 32], sizes = [8, 32], strides = [1, 1]} : vector<8x128xf32> to vector<8x32xf32>
    %157 = vector.extract_strided_slice %154 {offsets = [0, 64], sizes = [8, 32], strides = [1, 1]} : vector<8x128xf32> to vector<8x32xf32>
    %158 = vector.extract_strided_slice %154 {offsets = [0, 96], sizes = [8, 32], strides = [1, 1]} : vector<8x128xf32> to vector<8x32xf32>
    %159 = arith.mulf %156, %125 : vector<8x32xf32>
    %160 = arith.mulf %155, %157 : vector<8x32xf32>
    %161 = arith.addf %159, %160 : vector<8x32xf32>
    %162 = math.tanh %161 : vector<8x32xf32>
    %163 = arith.mulf %158, %162 : vector<8x32xf32>
    %164 = arith.truncf %163 : vector<8x32xf32> to vector<8x32xbf16>
    %cst_38 = arith.constant dense<0.000000e+00> : vector<8x128xf32>
    %165 = tpu.matmul %164, %3, %cst_38 {dimension_numbers = #tpu.dot_dimension_numbers<[1], [0], [0], [1], [0, 0, 1, 1], [], []>} : vector<8x32xbf16>, vector<32x128xbf16>, vector<8x128xf32> -> vector<8x128xf32>
    %166 = arith.truncf %146 : vector<8x32xf32> to vector<8x32xbf16>
    %cst_39 = arith.constant dense<0.000000e+00> : vector<8x128xf32>
    %167 = tpu.matmul %166, %4, %cst_39 {dimension_numbers = #tpu.dot_dimension_numbers<[1], [0], [0], [1], [0, 0, 1, 1], [], []>} : vector<8x32xbf16>, vector<32x128xbf16>, vector<8x128xf32> -> vector<8x128xf32>
    %168 = arith.addf %165, %167 : vector<8x128xf32>
    %169 = arith.addf %168, %7 : vector<8x128xf32>
    %170 = arith.mulf %169, %31 : vector<8x128xf32>
    %171 = math.tanh %170 : vector<8x128xf32>
    %172 = arith.mulf %171, %31 : vector<8x128xf32>
    %173 = arith.addf %172, %34 : vector<8x128xf32>
    %174 = vector.extract_strided_slice %173 {offsets = [0, 0], sizes = [8, 32], strides = [1, 1]} : vector<8x128xf32> to vector<8x32xf32>
    %175 = vector.extract_strided_slice %173 {offsets = [0, 32], sizes = [8, 32], strides = [1, 1]} : vector<8x128xf32> to vector<8x32xf32>
    %176 = vector.extract_strided_slice %173 {offsets = [0, 64], sizes = [8, 32], strides = [1, 1]} : vector<8x128xf32> to vector<8x32xf32>
    %177 = vector.extract_strided_slice %173 {offsets = [0, 96], sizes = [8, 32], strides = [1, 1]} : vector<8x128xf32> to vector<8x32xf32>
    %178 = arith.mulf %175, %144 : vector<8x32xf32>
    %179 = arith.mulf %174, %176 : vector<8x32xf32>
    %180 = arith.addf %178, %179 : vector<8x32xf32>
    %181 = math.tanh %180 : vector<8x32xf32>
    %182 = arith.mulf %177, %181 : vector<8x32xf32>
    %183 = vector.extract_strided_slice %22 {offsets = [32, 0], sizes = [8, 128], strides = [1, 1]} : vector<64x128xf32> to vector<8x128xf32>
    %184 = arith.truncf %163 : vector<8x32xf32> to vector<8x32xbf16>
    %cst_40 = arith.constant dense<0.000000e+00> : vector<8x128xf32>
    %185 = tpu.matmul %184, %1, %cst_40 {dimension_numbers = #tpu.dot_dimension_numbers<[1], [0], [0], [1], [0, 0, 1, 1], [], []>} : vector<8x32xbf16>, vector<32x128xbf16>, vector<8x128xf32> -> vector<8x128xf32>
    %186 = arith.addf %183, %185 : vector<8x128xf32>
    %187 = arith.mulf %186, %31 : vector<8x128xf32>
    %188 = math.tanh %187 : vector<8x128xf32>
    %189 = arith.mulf %188, %31 : vector<8x128xf32>
    %190 = arith.addf %189, %34 : vector<8x128xf32>
    %191 = vector.extract_strided_slice %190 {offsets = [0, 0], sizes = [8, 32], strides = [1, 1]} : vector<8x128xf32> to vector<8x32xf32>
    %192 = vector.extract_strided_slice %190 {offsets = [0, 32], sizes = [8, 32], strides = [1, 1]} : vector<8x128xf32> to vector<8x32xf32>
    %193 = vector.extract_strided_slice %190 {offsets = [0, 64], sizes = [8, 32], strides = [1, 1]} : vector<8x128xf32> to vector<8x32xf32>
    %194 = vector.extract_strided_slice %190 {offsets = [0, 96], sizes = [8, 32], strides = [1, 1]} : vector<8x128xf32> to vector<8x32xf32>
    %195 = arith.mulf %192, %161 : vector<8x32xf32>
    %196 = arith.mulf %191, %193 : vector<8x32xf32>
    %197 = arith.addf %195, %196 : vector<8x32xf32>
    %198 = math.tanh %197 : vector<8x32xf32>
    %199 = arith.mulf %194, %198 : vector<8x32xf32>
    %200 = arith.truncf %199 : vector<8x32xf32> to vector<8x32xbf16>
    %cst_41 = arith.constant dense<0.000000e+00> : vector<8x128xf32>
    %201 = tpu.matmul %200, %3, %cst_41 {dimension_numbers = #tpu.dot_dimension_numbers<[1], [0], [0], [1], [0, 0, 1, 1], [], []>} : vector<8x32xbf16>, vector<32x128xbf16>, vector<8x128xf32> -> vector<8x128xf32>
    %202 = arith.truncf %182 : vector<8x32xf32> to vector<8x32xbf16>
    %cst_42 = arith.constant dense<0.000000e+00> : vector<8x128xf32>
    %203 = tpu.matmul %202, %4, %cst_42 {dimension_numbers = #tpu.dot_dimension_numbers<[1], [0], [0], [1], [0, 0, 1, 1], [], []>} : vector<8x32xbf16>, vector<32x128xbf16>, vector<8x128xf32> -> vector<8x128xf32>
    %204 = arith.addf %201, %203 : vector<8x128xf32>
    %205 = arith.addf %204, %7 : vector<8x128xf32>
    %206 = arith.mulf %205, %31 : vector<8x128xf32>
    %207 = math.tanh %206 : vector<8x128xf32>
    %208 = arith.mulf %207, %31 : vector<8x128xf32>
    %209 = arith.addf %208, %34 : vector<8x128xf32>
    %210 = vector.extract_strided_slice %209 {offsets = [0, 0], sizes = [8, 32], strides = [1, 1]} : vector<8x128xf32> to vector<8x32xf32>
    %211 = vector.extract_strided_slice %209 {offsets = [0, 32], sizes = [8, 32], strides = [1, 1]} : vector<8x128xf32> to vector<8x32xf32>
    %212 = vector.extract_strided_slice %209 {offsets = [0, 64], sizes = [8, 32], strides = [1, 1]} : vector<8x128xf32> to vector<8x32xf32>
    %213 = vector.extract_strided_slice %209 {offsets = [0, 96], sizes = [8, 32], strides = [1, 1]} : vector<8x128xf32> to vector<8x32xf32>
    %214 = arith.mulf %211, %180 : vector<8x32xf32>
    %215 = arith.mulf %210, %212 : vector<8x32xf32>
    %216 = arith.addf %214, %215 : vector<8x32xf32>
    %217 = math.tanh %216 : vector<8x32xf32>
    %218 = arith.mulf %213, %217 : vector<8x32xf32>
    %219 = vector.extract_strided_slice %22 {offsets = [40, 0], sizes = [8, 128], strides = [1, 1]} : vector<64x128xf32> to vector<8x128xf32>
    %220 = arith.truncf %199 : vector<8x32xf32> to vector<8x32xbf16>
    %cst_43 = arith.constant dense<0.000000e+00> : vector<8x128xf32>
    %221 = tpu.matmul %220, %1, %cst_43 {dimension_numbers = #tpu.dot_dimension_numbers<[1], [0], [0], [1], [0, 0, 1, 1], [], []>} : vector<8x32xbf16>, vector<32x128xbf16>, vector<8x128xf32> -> vector<8x128xf32>
    %222 = arith.addf %219, %221 : vector<8x128xf32>
    %223 = arith.mulf %222, %31 : vector<8x128xf32>
    %224 = math.tanh %223 : vector<8x128xf32>
    %225 = arith.mulf %224, %31 : vector<8x128xf32>
    %226 = arith.addf %225, %34 : vector<8x128xf32>
    %227 = vector.extract_strided_slice %226 {offsets = [0, 0], sizes = [8, 32], strides = [1, 1]} : vector<8x128xf32> to vector<8x32xf32>
    %228 = vector.extract_strided_slice %226 {offsets = [0, 32], sizes = [8, 32], strides = [1, 1]} : vector<8x128xf32> to vector<8x32xf32>
    %229 = vector.extract_strided_slice %226 {offsets = [0, 64], sizes = [8, 32], strides = [1, 1]} : vector<8x128xf32> to vector<8x32xf32>
    %230 = vector.extract_strided_slice %226 {offsets = [0, 96], sizes = [8, 32], strides = [1, 1]} : vector<8x128xf32> to vector<8x32xf32>
    %231 = arith.mulf %228, %197 : vector<8x32xf32>
    %232 = arith.mulf %227, %229 : vector<8x32xf32>
    %233 = arith.addf %231, %232 : vector<8x32xf32>
    %234 = math.tanh %233 : vector<8x32xf32>
    %235 = arith.mulf %230, %234 : vector<8x32xf32>
    %236 = arith.truncf %235 : vector<8x32xf32> to vector<8x32xbf16>
    %cst_44 = arith.constant dense<0.000000e+00> : vector<8x128xf32>
    %237 = tpu.matmul %236, %3, %cst_44 {dimension_numbers = #tpu.dot_dimension_numbers<[1], [0], [0], [1], [0, 0, 1, 1], [], []>} : vector<8x32xbf16>, vector<32x128xbf16>, vector<8x128xf32> -> vector<8x128xf32>
    %238 = arith.truncf %218 : vector<8x32xf32> to vector<8x32xbf16>
    %cst_45 = arith.constant dense<0.000000e+00> : vector<8x128xf32>
    %239 = tpu.matmul %238, %4, %cst_45 {dimension_numbers = #tpu.dot_dimension_numbers<[1], [0], [0], [1], [0, 0, 1, 1], [], []>} : vector<8x32xbf16>, vector<32x128xbf16>, vector<8x128xf32> -> vector<8x128xf32>
    %240 = arith.addf %237, %239 : vector<8x128xf32>
    %241 = arith.addf %240, %7 : vector<8x128xf32>
    %242 = arith.mulf %241, %31 : vector<8x128xf32>
    %243 = math.tanh %242 : vector<8x128xf32>
    %244 = arith.mulf %243, %31 : vector<8x128xf32>
    %245 = arith.addf %244, %34 : vector<8x128xf32>
    %246 = vector.extract_strided_slice %245 {offsets = [0, 0], sizes = [8, 32], strides = [1, 1]} : vector<8x128xf32> to vector<8x32xf32>
    %247 = vector.extract_strided_slice %245 {offsets = [0, 32], sizes = [8, 32], strides = [1, 1]} : vector<8x128xf32> to vector<8x32xf32>
    %248 = vector.extract_strided_slice %245 {offsets = [0, 64], sizes = [8, 32], strides = [1, 1]} : vector<8x128xf32> to vector<8x32xf32>
    %249 = vector.extract_strided_slice %245 {offsets = [0, 96], sizes = [8, 32], strides = [1, 1]} : vector<8x128xf32> to vector<8x32xf32>
    %250 = arith.mulf %247, %216 : vector<8x32xf32>
    %251 = arith.mulf %246, %248 : vector<8x32xf32>
    %252 = arith.addf %250, %251 : vector<8x32xf32>
    %253 = math.tanh %252 : vector<8x32xf32>
    %254 = arith.mulf %249, %253 : vector<8x32xf32>
    %255 = vector.extract_strided_slice %22 {offsets = [48, 0], sizes = [8, 128], strides = [1, 1]} : vector<64x128xf32> to vector<8x128xf32>
    %256 = arith.truncf %235 : vector<8x32xf32> to vector<8x32xbf16>
    %cst_46 = arith.constant dense<0.000000e+00> : vector<8x128xf32>
    %257 = tpu.matmul %256, %1, %cst_46 {dimension_numbers = #tpu.dot_dimension_numbers<[1], [0], [0], [1], [0, 0, 1, 1], [], []>} : vector<8x32xbf16>, vector<32x128xbf16>, vector<8x128xf32> -> vector<8x128xf32>
    %258 = arith.addf %255, %257 : vector<8x128xf32>
    %259 = arith.mulf %258, %31 : vector<8x128xf32>
    %260 = math.tanh %259 : vector<8x128xf32>
    %261 = arith.mulf %260, %31 : vector<8x128xf32>
    %262 = arith.addf %261, %34 : vector<8x128xf32>
    %263 = vector.extract_strided_slice %262 {offsets = [0, 0], sizes = [8, 32], strides = [1, 1]} : vector<8x128xf32> to vector<8x32xf32>
    %264 = vector.extract_strided_slice %262 {offsets = [0, 32], sizes = [8, 32], strides = [1, 1]} : vector<8x128xf32> to vector<8x32xf32>
    %265 = vector.extract_strided_slice %262 {offsets = [0, 64], sizes = [8, 32], strides = [1, 1]} : vector<8x128xf32> to vector<8x32xf32>
    %266 = vector.extract_strided_slice %262 {offsets = [0, 96], sizes = [8, 32], strides = [1, 1]} : vector<8x128xf32> to vector<8x32xf32>
    %267 = arith.mulf %264, %233 : vector<8x32xf32>
    %268 = arith.mulf %263, %265 : vector<8x32xf32>
    %269 = arith.addf %267, %268 : vector<8x32xf32>
    %270 = math.tanh %269 : vector<8x32xf32>
    %271 = arith.mulf %266, %270 : vector<8x32xf32>
    %272 = arith.truncf %271 : vector<8x32xf32> to vector<8x32xbf16>
    %cst_47 = arith.constant dense<0.000000e+00> : vector<8x128xf32>
    %273 = tpu.matmul %272, %3, %cst_47 {dimension_numbers = #tpu.dot_dimension_numbers<[1], [0], [0], [1], [0, 0, 1, 1], [], []>} : vector<8x32xbf16>, vector<32x128xbf16>, vector<8x128xf32> -> vector<8x128xf32>
    %274 = arith.truncf %254 : vector<8x32xf32> to vector<8x32xbf16>
    %cst_48 = arith.constant dense<0.000000e+00> : vector<8x128xf32>
    %275 = tpu.matmul %274, %4, %cst_48 {dimension_numbers = #tpu.dot_dimension_numbers<[1], [0], [0], [1], [0, 0, 1, 1], [], []>} : vector<8x32xbf16>, vector<32x128xbf16>, vector<8x128xf32> -> vector<8x128xf32>
    %276 = arith.addf %273, %275 : vector<8x128xf32>
    %277 = arith.addf %276, %7 : vector<8x128xf32>
    %278 = arith.mulf %277, %31 : vector<8x128xf32>
    %279 = math.tanh %278 : vector<8x128xf32>
    %280 = arith.mulf %279, %31 : vector<8x128xf32>
    %281 = arith.addf %280, %34 : vector<8x128xf32>
    %282 = vector.extract_strided_slice %281 {offsets = [0, 0], sizes = [8, 32], strides = [1, 1]} : vector<8x128xf32> to vector<8x32xf32>
    %283 = vector.extract_strided_slice %281 {offsets = [0, 32], sizes = [8, 32], strides = [1, 1]} : vector<8x128xf32> to vector<8x32xf32>
    %284 = vector.extract_strided_slice %281 {offsets = [0, 64], sizes = [8, 32], strides = [1, 1]} : vector<8x128xf32> to vector<8x32xf32>
    %285 = vector.extract_strided_slice %281 {offsets = [0, 96], sizes = [8, 32], strides = [1, 1]} : vector<8x128xf32> to vector<8x32xf32>
    %286 = arith.mulf %283, %252 : vector<8x32xf32>
    %287 = arith.mulf %282, %284 : vector<8x32xf32>
    %288 = arith.addf %286, %287 : vector<8x32xf32>
    %289 = math.tanh %288 : vector<8x32xf32>
    %290 = arith.mulf %285, %289 : vector<8x32xf32>
    %291 = vector.extract_strided_slice %22 {offsets = [56, 0], sizes = [8, 128], strides = [1, 1]} : vector<64x128xf32> to vector<8x128xf32>
    %292 = arith.truncf %271 : vector<8x32xf32> to vector<8x32xbf16>
    %cst_49 = arith.constant dense<0.000000e+00> : vector<8x128xf32>
    %293 = tpu.matmul %292, %1, %cst_49 {dimension_numbers = #tpu.dot_dimension_numbers<[1], [0], [0], [1], [0, 0, 1, 1], [], []>} : vector<8x32xbf16>, vector<32x128xbf16>, vector<8x128xf32> -> vector<8x128xf32>
    %294 = arith.addf %291, %293 : vector<8x128xf32>
    %295 = arith.mulf %294, %31 : vector<8x128xf32>
    %296 = math.tanh %295 : vector<8x128xf32>
    %297 = arith.mulf %296, %31 : vector<8x128xf32>
    %298 = arith.addf %297, %34 : vector<8x128xf32>
    %299 = vector.extract_strided_slice %298 {offsets = [0, 0], sizes = [8, 32], strides = [1, 1]} : vector<8x128xf32> to vector<8x32xf32>
    %300 = vector.extract_strided_slice %298 {offsets = [0, 32], sizes = [8, 32], strides = [1, 1]} : vector<8x128xf32> to vector<8x32xf32>
    %301 = vector.extract_strided_slice %298 {offsets = [0, 64], sizes = [8, 32], strides = [1, 1]} : vector<8x128xf32> to vector<8x32xf32>
    %302 = vector.extract_strided_slice %298 {offsets = [0, 96], sizes = [8, 32], strides = [1, 1]} : vector<8x128xf32> to vector<8x32xf32>
    %303 = arith.mulf %300, %269 : vector<8x32xf32>
    %304 = arith.mulf %299, %301 : vector<8x32xf32>
    %305 = arith.addf %303, %304 : vector<8x32xf32>
    %306 = math.tanh %305 : vector<8x32xf32>
    %307 = arith.mulf %302, %306 : vector<8x32xf32>
    %308 = arith.truncf %307 : vector<8x32xf32> to vector<8x32xbf16>
    %cst_50 = arith.constant dense<0.000000e+00> : vector<8x128xf32>
    %309 = tpu.matmul %308, %3, %cst_50 {dimension_numbers = #tpu.dot_dimension_numbers<[1], [0], [0], [1], [0, 0, 1, 1], [], []>} : vector<8x32xbf16>, vector<32x128xbf16>, vector<8x128xf32> -> vector<8x128xf32>
    %310 = arith.truncf %290 : vector<8x32xf32> to vector<8x32xbf16>
    %cst_51 = arith.constant dense<0.000000e+00> : vector<8x128xf32>
    %311 = tpu.matmul %310, %4, %cst_51 {dimension_numbers = #tpu.dot_dimension_numbers<[1], [0], [0], [1], [0, 0, 1, 1], [], []>} : vector<8x32xbf16>, vector<32x128xbf16>, vector<8x128xf32> -> vector<8x128xf32>
    %312 = arith.addf %309, %311 : vector<8x128xf32>
    %313 = arith.addf %312, %7 : vector<8x128xf32>
    %314 = arith.mulf %313, %31 : vector<8x128xf32>
    %315 = math.tanh %314 : vector<8x128xf32>
    %316 = arith.mulf %315, %31 : vector<8x128xf32>
    %317 = arith.addf %316, %34 : vector<8x128xf32>
    %318 = vector.extract_strided_slice %317 {offsets = [0, 0], sizes = [8, 32], strides = [1, 1]} : vector<8x128xf32> to vector<8x32xf32>
    %319 = vector.extract_strided_slice %317 {offsets = [0, 32], sizes = [8, 32], strides = [1, 1]} : vector<8x128xf32> to vector<8x32xf32>
    %320 = vector.extract_strided_slice %317 {offsets = [0, 64], sizes = [8, 32], strides = [1, 1]} : vector<8x128xf32> to vector<8x32xf32>
    %321 = vector.extract_strided_slice %317 {offsets = [0, 96], sizes = [8, 32], strides = [1, 1]} : vector<8x128xf32> to vector<8x32xf32>
    %322 = arith.mulf %319, %288 : vector<8x32xf32>
    %323 = arith.mulf %318, %320 : vector<8x32xf32>
    %324 = arith.addf %322, %323 : vector<8x32xf32>
    %325 = math.tanh %324 : vector<8x32xf32>
    %326 = arith.mulf %321, %325 : vector<8x32xf32>
    %327 = tpu.concatenate %307, %305, %326, %324 in 1 : vector<8x32xf32>, vector<8x32xf32>, vector<8x32xf32>, vector<8x32xf32> -> vector<8x128xf32>
    %328 = math.tanh %327 : vector<8x128xf32>
    %329 = arith.truncf %328 : vector<8x128xf32> to vector<8x128xbf16>
    %cst_52 = arith.constant dense<0.000000e+00> : vector<8x32xf32>
    %330 = tpu.matmul %329, %8, %cst_52 {dimension_numbers = #tpu.dot_dimension_numbers<[1], [0], [0], [1], [0, 0, 1, 1], [], []>} : vector<8x128xbf16>, vector<128x32xbf16>, vector<8x32xf32> -> vector<8x32xf32>
    %331 = vector.broadcast %9 : vector<1x32xf32> to vector<8x32xf32>
    %332 = arith.addf %330, %331 : vector<8x32xf32>
    %333 = vector.extract_strided_slice %332 {offsets = [0, 0], sizes = [2, 32], strides = [1, 1]} : vector<8x32xf32> to vector<2x32xf32>
    %c0_53 = arith.constant 0 : index
    %c0_54 = arith.constant 0 : index
    %334 = vector.load %arg10[%c0_53, %c0_54] : memref<2x32xf32, #tpu.memory_space<vmem>>, vector<2x32xf32>
    tpu.vector_store %arg10[%c0_53, %c0_54], %333 {strides = array<i32>} : memref<2x32xf32, #tpu.memory_space<vmem>>, vector<2x32xf32>,
    return
  }
}

</mosaic_0001>

<llo_original>
// kernel: tpu_custom_call.1
$region0: #{tpu_custom_call.1}
  #allocation0 [shape = 'u32[]', space=smem, size = 0x4, offset = 0x4, fixed_abs, tag = 'smem constant byte address 0x4 - core index']
  #allocation1 [shape = 'u32[72,128]{1,0:T(1,128)}', space=vmem, size = 0x9000, scoped, tag = 'internal scratch']
  %s0 = inlined_call_operand.vmem [shape: s32[64,1], index: 0, kind: input, shape index: {}]
  %s1 = inlined_call_operand.vmem [shape: f32[56,32], index: 1, kind: input, shape index: {}]
  %s2 = inlined_call_operand.vmem [shape: bf16[32,128], index: 2, kind: input, shape index: {}]
  %s3 = inlined_call_operand.vmem [shape: bf16[32,128], index: 3, kind: input, shape index: {}]
  %s4 = inlined_call_operand.vmem [shape: f32[1,128], index: 4, kind: input, shape index: {}]
  %s5 = inlined_call_operand.vmem [shape: bf16[32,128], index: 5, kind: input, shape index: {}]
  %s6 = inlined_call_operand.vmem [shape: bf16[32,128], index: 6, kind: input, shape index: {}]
  %s7 = inlined_call_operand.vmem [shape: f32[1,128], index: 7, kind: input, shape index: {}]
  %s8 = inlined_call_operand.vmem [shape: bf16[128,32], index: 8, kind: input, shape index: {}]
  %s9 = inlined_call_operand.vmem [shape: f32[1,32], index: 9, kind: input, shape index: {}]
  %s10 = inlined_call_operand.hbm [shape: f32[2,32], index: 10, kind: output, shape index: {}]
  %s11 = sld [smem:[#allocation0]]
  $region50: #{tpu_custom_call.1} parent=0
    _
  %s13 = ssub.s32 1, %s11
  %s14 = scalar_select 0, %s13, %s11
  $region1: #{tpu_custom_call.1} parent=0
    #allocation2 [shape = 'u8[1024]{0}', space=vmem, size = 0x400, scoped, tag = 'output window, operand 0, single buffered']
    #allocation3 [shape = 's32[1]{0}', space=sflag, size = 0x4, scoped, tag = 'scoped memory for tpu_custom_call.1']
    %15 = vsyncpa [#allocation3], 0
    // Predicated region
    $region2: #{tpu_custom_call.1} parent=1 // pred_check
      _
    $region3: #{tpu_custom_call.1} parent=1 // pred_check_branch
      %17 = sbr.rel (0) target = $region5
    $region4: #{tpu_custom_call.1} parent=1 // pred_region
      _
    $region5: #{tpu_custom_call.1} parent=1 // pred_fallthru
      _
    // Predicated region
    $region6: #{tpu_custom_call.1} parent=1 // pred_check
      _
    $region7: #{tpu_custom_call.1} parent=1 // pred_check_branch
      %19 = sbr.rel (0) target = $region9
    $region8: #{tpu_custom_call.1} parent=1 // pred_region
      _
    $region9: #{tpu_custom_call.1} parent=1 // pred_fallthru
      _
    // Predicated region
    $region10: #{tpu_custom_call.1} parent=1 // pred_check
      _
    $region11: #{tpu_custom_call.1} parent=1 // pred_check_branch
      %21 = sbr.rel (0) target = $region13
    $region12: #{tpu_custom_call.1} parent=1 // pred_region
      _
    $region13: #{tpu_custom_call.1} parent=1 // pred_fallthru
      _
    // Predicated region
    $region14: #{tpu_custom_call.1} parent=1 // pred_check
      _
    $region15: #{tpu_custom_call.1} parent=1 // pred_check_branch
      %23 = sbr.rel (0) target = $region17
    $region16: #{tpu_custom_call.1} parent=1 // pred_region
      _
    $region17: #{tpu_custom_call.1} parent=1 // pred_fallthru
      _
    // Predicated region
    $region18: #{tpu_custom_call.1} parent=1 // pred_check
      _
    $region19: #{tpu_custom_call.1} parent=1 // pred_check_branch
      %25 = sbr.rel (0) target = $region21
    $region20: #{tpu_custom_call.1} parent=1 // pred_region
      _
    $region21: #{tpu_custom_call.1} parent=1 // pred_fallthru
      _
    // Predicated region
    $region22: #{tpu_custom_call.1} parent=1 // pred_check
      _
    $region23: #{tpu_custom_call.1} parent=1 // pred_check_branch
      %27 = sbr.rel (0) target = $region25
    $region24: #{tpu_custom_call.1} parent=1 // pred_region
      _
    $region25: #{tpu_custom_call.1} parent=1 // pred_fallthru
      _
    // Predicated region
    $region26: #{tpu_custom_call.1} parent=1 // pred_check
      _
    $region27: #{tpu_custom_call.1} parent=1 // pred_check_branch
      %29 = sbr.rel (0) target = $region29
    $region28: #{tpu_custom_call.1} parent=1 // pred_region
      _
    $region29: #{tpu_custom_call.1} parent=1 // pred_fallthru
      _
    // Predicated region
    $region30: #{tpu_custom_call.1} parent=1 // pred_check
      _
    $region31: #{tpu_custom_call.1} parent=1 // pred_check_branch
      %31 = sbr.rel (0) target = $region33
    $region32: #{tpu_custom_call.1} parent=1 // pred_region
      _
    $region33: #{tpu_custom_call.1} parent=1 // pred_fallthru
      _
    // Predicated region
    $region34: #{tpu_custom_call.1} parent=1 // pred_check
      _
    $region35: #{tpu_custom_call.1} parent=1 // pred_check_branch
      %33 = sbr.rel (0) target = $region37
    $region36: #{tpu_custom_call.1} parent=1 // pred_region
      _
    $region37: #{tpu_custom_call.1} parent=1 // pred_fallthru
      _
    // Predicated region
    $region38: #{tpu_custom_call.1} parent=1 // pred_check
      _
    $region39: #{tpu_custom_call.1} parent=1 // pred_check_branch
      %35 = sbr.rel (0) target = $region41
    $region40: #{tpu_custom_call.1} parent=1 // pred_region
      _
    $region41: #{tpu_custom_call.1} parent=1 // pred_fallthru
      _
    %v37 = vld [vmem:[%s2] sm:$0xf]
    %v38 = vld [vmem:[%s2 + $0x4] sm:$0xf]
    %v39 = vld [vmem:[%s2 + $0x8] sm:$0xf]
    %v40 = vld [vmem:[%s2 + $0xc] sm:$0xf]
    %v41 = vld [vmem:[%s3] sm:$0xf]
    %v42 = vld [vmem:[%s3 + $0x4] sm:$0xf]
    %v43 = vld [vmem:[%s3 + $0x8] sm:$0xf]
    %v44 = vld [vmem:[%s3 + $0xc] sm:$0xf]
    %v45 = vld [vmem:[%s4] sm:$0x1]
    %v46 = vld [vmem:[%s5] sm:$0xf]
    %v47 = vld [vmem:[%s5 + $0x4] sm:$0xf]
    %v48 = vld [vmem:[%s5 + $0x8] sm:$0xf]
    %v49 = vld [vmem:[%s5 + $0xc] sm:$0xf]
    %v50 = vld [vmem:[%s6] sm:$0xf]
    %v51 = vld [vmem:[%s6 + $0x4] sm:$0xf]
    %v52 = vld [vmem:[%s6 + $0x8] sm:$0xf]
    %v53 = vld [vmem:[%s6 + $0xc] sm:$0xf]
    %v54 = vld [vmem:[%s7] sm:$0x1]
    %v56 = vperm.slane %v54, 0
    %v58 = vld [vmem:[%s8] sm:$0xf]
    %v59 = vld [vmem:[%s8 + $0x4] sm:$0xf]
    %v60 = vld [vmem:[%s8 + $0x8] sm:$0xf]
    %v61 = vld [vmem:[%s8 + $0xc] sm:$0xf]
    %v62 = vld [vmem:[%s8 + $0x10] sm:$0xf]
    %v63 = vld [vmem:[%s8 + $0x14] sm:$0xf]
    %v64 = vld [vmem:[%s8 + $0x18] sm:$0xf]
    %v65 = vld [vmem:[%s8 + $0x1c] sm:$0xf]
    %v66 = vld [vmem:[%s8 + $0x20] sm:$0xf]
    %v67 = vld [vmem:[%s8 + $0x24] sm:$0xf]
    %v68 = vld [vmem:[%s8 + $0x28] sm:$0xf]
    %v69 = vld [vmem:[%s8 + $0x2c] sm:$0xf]
    %v70 = vld [vmem:[%s8 + $0x30] sm:$0xf]
    %v71 = vld [vmem:[%s8 + $0x34] sm:$0xf]
    %v72 = vld [vmem:[%s8 + $0x38] sm:$0xf]
    %v73 = vld [vmem:[%s8 + $0x3c] sm:$0xf]
    %v74 = vld [vmem:[%s9] sm:$0x1]
    %v75 = vld [vmem:[%s0] sm:$0xff]
    %v76 = vld [vmem:[%s0 + $0x8] sm:$0xff]
    %v77 = vld [vmem:[%s0 + $0x10] sm:$0xff]
    %v78 = vld [vmem:[%s0 + $0x18] sm:$0xff]
    %v79 = vld [vmem:[%s0 + $0x20] sm:$0xff]
    %v80 = vld [vmem:[%s0 + $0x28] sm:$0xff]
    %v81 = vld [vmem:[%s0 + $0x30] sm:$0xff]
    %v82 = vld [vmem:[%s0 + $0x38] sm:$0xff]
    %v83 = vlaneseq
    %v84 = vand.u32 %v83, 127
    %85 = vset.pattern.permute.xlu0 0
    %86 = vperm.xlu0 %85, %v75
    %v87 = vpop.permute.xlu0 %86
    %88 = vset.pattern.permute.xlu0 0
    %89 = vperm.xlu0 %88, %v76
    %v90 = vpop.permute.xlu0 %89
    %91 = vset.pattern.permute.xlu0 0
    %92 = vperm.xlu0 %91, %v77
    %v93 = vpop.permute.xlu0 %92
    %94 = vset.pattern.permute.xlu0 0
    %95 = vperm.xlu0 %94, %v78
    %v96 = vpop.permute.xlu0 %95
    %97 = vset.pattern.permute.xlu0 0
    %98 = vperm.xlu0 %97, %v79
    %v99 = vpop.permute.xlu0 %98
    %100 = vset.pattern.permute.xlu0 0
    %101 = vperm.xlu0 %100, %v80
    %v102 = vpop.permute.xlu0 %101
    %103 = vset.pattern.permute.xlu0 0
    %104 = vperm.xlu0 %103, %v81
    %v105 = vpop.permute.xlu0 %104
    %106 = vset.pattern.permute.xlu0 0
    %107 = vperm.xlu0 %106, %v82
    %v108 = vpop.permute.xlu0 %107
    %vm109 = vcmp.eq.s32.totalorder %v84, %v87
    %vm110 = vcmp.eq.s32.totalorder %v84, %v90
    %vm111 = vcmp.eq.s32.totalorder %v84, %v93
    %vm112 = vcmp.eq.s32.totalorder %v84, %v96
    %vm113 = vcmp.eq.s32.totalorder %v84, %v99
    %vm114 = vcmp.eq.s32.totalorder %v84, %v102
    %vm115 = vcmp.eq.s32.totalorder %v84, %v105
    %vm116 = vcmp.eq.s32.totalorder %v84, %v108
    %v117 = vsel %vm109, 1, 0
    %v118 = vsel %vm110, 1, 0
    %v119 = vsel %vm111, 1, 0
    %v120 = vsel %vm112, 1, 0
    %v121 = vsel %vm113, 1, 0
    %v122 = vsel %vm114, 1, 0
    %v123 = vsel %vm115, 1, 0
    %v124 = vsel %vm116, 1, 0
    %v125 = vcvt.s32.f32 %v117
    %v126 = vcvt.s32.f32 %v118
    %v127 = vcvt.s32.f32 %v119
    %v128 = vcvt.s32.f32 %v120
    %v129 = vcvt.s32.f32 %v121
    %v130 = vcvt.s32.f32 %v122
    %v131 = vcvt.s32.f32 %v123
    %v132 = vcvt.s32.f32 %v124
    %v133 = vld [vmem:[%s1] sm:$0xff]
    %v134 = vld [vmem:[%s1 + $0x8] sm:$0xff]
    %v135 = vld [vmem:[%s1 + $0x10] sm:$0xff]
    %v136 = vld [vmem:[%s1 + $0x18] sm:$0xff]
    %v137 = vld [vmem:[%s1 + $0x20] sm:$0xff]
    %v138 = vld [vmem:[%s1 + $0x28] sm:$0xff]
    %v139 = vld [vmem:[%s1 + $0x30] sm:$0xff]
    %vm140 = vcmask 457728
    %v142 = vsel %vm140, %v125, 0
    %v145 = vsel %vm140, %v126, 0
    %v148 = vsel %vm140, %v127, 0
    %v151 = vsel %vm140, %v128, 0
    %v154 = vsel %vm140, %v129, 0
    %v157 = vsel %vm140, %v130, 0
    %v160 = vsel %vm140, %v131, 0
    %v163 = vsel %vm140, %v132, 0
    %165 = vmatpush.msra.mxu0 0.0
    %166 = vmatpush.msra.mxu0 0.0
    %167 = vmatpush.msra.mxu0 0.0
    %168 = vmatpush.msra.mxu0 0.0
    %169 = vmatpush.msra.mxu0 0.0
    %170 = vmatpush.msra.mxu0 0.0
    %171 = vmatpush.msra.mxu0 0.0
    %172 = vmatpush.msra.mxu0 0.0
    %173 = vmatpush.msra.mxu0 0.0
    %174 = vmatpush.msra.mxu0 %v139
    %175 = vmatpush.msra.mxu0 %v138
    %176 = vmatpush.msra.mxu0 %v137
    %177 = vmatpush.msra.mxu0 %v136
    %178 = vmatpush.msra.mxu0 %v135
    %179 = vmatpush.msra.mxu0 %v134
    %180 = vmatpush.msra.mxu0 %v133
    %181 = vmatmul.f32.gmra.mxu0 %v142
    %v182 = vpop.f32.mrf.mxu0
    %v183 = vadd.f32 0.0, %v182
    %184 = vmatmul.f32.gmra.mxu0 %v145
    %v185 = vpop.f32.mrf.mxu0
    %v186 = vadd.f32 0.0, %v185
    %187 = vmatmul.f32.gmra.mxu0 %v148
    %v188 = vpop.f32.mrf.mxu0
    %v189 = vadd.f32 0.0, %v188
    %190 = vmatmul.f32.gmra.mxu0 %v151
    %v191 = vpop.f32.mrf.mxu0
    %v192 = vadd.f32 0.0, %v191
    %193 = vmatmul.f32.gmra.mxu0 %v154
    %v194 = vpop.f32.mrf.mxu0
    %v195 = vadd.f32 0.0, %v194
    %196 = vmatmul.f32.gmra.mxu0 %v157
    %v197 = vpop.f32.mrf.mxu0
    %v198 = vadd.f32 0.0, %v197
    %199 = vmatmul.f32.gmra.mxu0 %v160
    %v200 = vpop.f32.mrf.mxu0
    %v201 = vadd.f32 0.0, %v200
    %202 = vmatmul.f32.gmra.mxu0 %v163
    %v203 = vpop.f32.mrf.mxu0
    %v204 = vadd.f32 0.0, %v203
    %205 = vdwg.mxu0
    %v206 = vtanh.pop %v183
    %v207 = vtanh.pop %v186
    %v208 = vtanh.pop %v189
    %v209 = vtanh.pop %v192
    %v210 = vtanh.pop %v195
    %v211 = vtanh.pop %v198
    %v212 = vtanh.pop %v201
    %v213 = vtanh.pop %v204
    %v214 = vpack.c.bf16 %v207, %v206
    %v215 = vpack.c.bf16 %v209, %v208
    %v216 = vpack.c.bf16 %v211, %v210
    %v217 = vpack.c.bf16 %v213, %v212
    %v219 = vperm.slane %v45, 0
    %v225 = vunpack.c.l.b16 %v37
    %v226 = vunpack.c.l.b16 %v38
    %v227 = vunpack.c.l.b16 %v39
    %v228 = vunpack.c.l.b16 %v40
    %v229 = vpack.c.b16 %v226, %v225
    %v230 = vpack.c.b16 %v228, %v227
    %vm233 = vcmask 261120
    %v235 = vsel %vm233, %v214, 0
    %v238 = vsel %vm233, %v215, 0
    %v241 = vsel %vm233, %v216, 0
    %v244 = vsel %vm233, %v217, 0
    %246 = vmatpush.bf16.msra.mxu0 0
    %247 = vmatpush.bf16.msra.mxu0 0
    %248 = vmatpush.bf16.msra.mxu0 0
    %249 = vmatpush.bf16.msra.mxu0 0
    %250 = vmatpush.bf16.msra.mxu0 0
    %251 = vmatpush.bf16.msra.mxu0 0
    %252 = vmatpush.bf16.msra.mxu0 %v230
    %253 = vmatpush.bf16.msra.mxu0 %v229
    %254 = vmatmul.bf16.gmra.mxu0 %v235
    %v255 = vpop.f32.mrf.mxu0
    %v256 = vadd.f32 %v219, %v255
    %v257 = vpop.f32.mrf.mxu0
    %v258 = vadd.f32 %v219, %v257
    %259 = vmatmul.bf16.gmra.mxu0 %v238
    %v260 = vpop.f32.mrf.mxu0
    %v261 = vadd.f32 %v219, %v260
    %v262 = vpop.f32.mrf.mxu0
    %v263 = vadd.f32 %v219, %v262
    %264 = vmatmul.bf16.gmra.mxu0 %v241
    %v265 = vpop.f32.mrf.mxu0
    %v266 = vadd.f32 %v219, %v265
    %v267 = vpop.f32.mrf.mxu0
    %v268 = vadd.f32 %v219, %v267
    %269 = vmatmul.bf16.gmra.mxu0 %v244
    %v270 = vpop.f32.mrf.mxu0
    %v271 = vadd.f32 %v219, %v270
    %v272 = vpop.f32.mrf.mxu0
    %v273 = vadd.f32 %v219, %v272
    %274 = vdwg.mxu0
    %vm275 = vcmp.ge.s32.totalorder %v84, 64
    %vm276 = vcmp.lt.s32.totalorder %v84, 96
    %vm277 = vmand %vm275, %vm276
    %v278 = vsel %vm277, 1.0, 0.5
    %v279 = vsel %vm277, 0.0, 0.5
    %v284 = vunpack.c.l.b16 %v41
    %v285 = vunpack.c.l.b16 %v42
    %v286 = vunpack.c.l.b16 %v43
    %v287 = vunpack.c.l.b16 %v44
    %v288 = vpack.c.b16 %v285, %v284
    %v289 = vpack.c.b16 %v287, %v286
    %v293 = vsel %vm233, 0, 0
    %295 = vmatpush.bf16.msra.mxu0 0
    %296 = vmatpush.bf16.msra.mxu0 0
    %297 = vmatpush.bf16.msra.mxu0 0
    %298 = vmatpush.bf16.msra.mxu0 0
    %299 = vmatpush.bf16.msra.mxu0 0
    %300 = vmatpush.bf16.msra.mxu0 0
    %301 = vmatpush.bf16.msra.mxu0 %v289
    %302 = vmatpush.bf16.msra.mxu0 %v288
    %303 = vmatmul.bf16.gmra.mxu0 %v293
    %v304 = vpop.f32.mrf.mxu0
    %v305 = vadd.f32 0.0, %v304
    %v306 = vpop.f32.mrf.mxu0
    %307 = vdwg.mxu0
    %v308 = vadd.f32 %v256, %v305
    %v309 = vmul.f32 %v308, %v278
    %v310 = vtanh.pop %v309
    %v311 = vmul.f32 %v310, %v278
    %v312 = vadd.f32 %v311, %v279
    %v313 = vmul.f32 %v312, 0.0
    %315 = vrot.lane.b32.xlu0 %v312, 64
    %v316 = vpop.permute.xlu0 %315
    %v318 = vmul.f32 %v312, %v316
    %320 = vrot.lane.b32.xlu0 %v318, 32
    %v321 = vpop.permute.xlu0 %320
    %v323 = vadd.f32 %v313, %v321
    %v324 = vtanh.pop %v323
    %326 = vrot.lane.b32.xlu0 %v324, 64
    %v327 = vpop.permute.xlu0 %326
    %v329 = vmul.f32 %v312, %v327
    %v330 = vpack.c.bf16 %v329, %v329
    %v335 = vunpack.c.l.b16 %v50
    %v336 = vunpack.c.l.b16 %v51
    %v337 = vunpack.c.l.b16 %v52
    %v338 = vunpack.c.l.b16 %v53
    %v339 = vpack.c.b16 %v336, %v335
    %v340 = vpack.c.b16 %v338, %v337
    %343 = vmatpush.bf16.msra.mxu0 0
    %344 = vmatpush.bf16.msra.mxu0 0
    %345 = vmatpush.bf16.msra.mxu0 0
    %346 = vmatpush.bf16.msra.mxu0 0
    %347 = vmatpush.bf16.msra.mxu0 0
    %348 = vmatpush.bf16.msra.mxu0 0
    %349 = vmatpush.bf16.msra.mxu0 %v340
    %350 = vmatpush.bf16.msra.mxu0 %v339
    %351 = vmatmul.bf16.gmra.mxu0 %v293
    %v352 = vpop.f32.mrf.mxu0
    %v353 = vadd.f32 0.0, %v352
    %v354 = vpop.f32.mrf.mxu0
    %355 = vdwg.mxu0
    %357 = vrot.lane.b32.xlu0 %v330, 32
    %v358 = vpop.permute.xlu0 %357
    %v363 = vunpack.c.l.b16 %v46
    %v364 = vunpack.c.l.b16 %v47
    %v365 = vunpack.c.l.b16 %v48
    %v366 = vunpack.c.l.b16 %v49
    %v367 = vpack.c.b16 %v364, %v363
    %v368 = vpack.c.b16 %v366, %v365
    %v372 = vsel %vm233, %v358, 0
    %374 = vmatpush.bf16.msra.mxu0 0
    %375 = vmatpush.bf16.msra.mxu0 0
    %376 = vmatpush.bf16.msra.mxu0 0
    %377 = vmatpush.bf16.msra.mxu0 0
    %378 = vmatpush.bf16.msra.mxu0 0
    %379 = vmatpush.bf16.msra.mxu0 0
    %380 = vmatpush.bf16.msra.mxu0 %v368
    %381 = vmatpush.bf16.msra.mxu0 %v367
    %382 = vmatmul.bf16.gmra.mxu0 %v372
    %v383 = vpop.f32.mrf.mxu0
    %v384 = vadd.f32 %v353, %v383
    %v385 = vpop.f32.mrf.mxu0
    %386 = vdwg.mxu0
    %v387 = vadd.f32 %v384, %v56
    %v388 = vmul.f32 %v387, %v278
    %v389 = vtanh.pop %v388
    %v390 = vmul.f32 %v389, %v278
    %v391 = vadd.f32 %v390, %v279
    %v392 = vmul.f32 %v391, 0.0
    %394 = vrot.lane.b32.xlu0 %v391, 64
    %v395 = vpop.permute.xlu0 %394
    %v397 = vmul.f32 %v391, %v395
    %399 = vrot.lane.b32.xlu0 %v397, 32
    %v400 = vpop.permute.xlu0 %399
    %v402 = vadd.f32 %v392, %v400
    %v403 = vtanh.pop %v402
    %405 = vrot.lane.b32.xlu0 %v403, 64
    %v406 = vpop.permute.xlu0 %405
    %v408 = vmul.f32 %v391, %v406
    %409 = vmatpush.bf16.msra.mxu0 0
    %410 = vmatpush.bf16.msra.mxu0 0
    %411 = vmatpush.bf16.msra.mxu0 0
    %412 = vmatpush.bf16.msra.mxu0 0
    %413 = vmatpush.bf16.msra.mxu0 0
    %414 = vmatpush.bf16.msra.mxu0 0
    %415 = vmatpush.bf16.msra.mxu0 %v289
    %416 = vmatpush.bf16.msra.mxu0 %v288
    %417 = vmatmul.bf16.gmra.mxu0 %v372
    %v418 = vpop.f32.mrf.mxu0
    %v419 = vadd.f32 0.0, %v418
    %v420 = vpop.f32.mrf.mxu0
    %421 = vdwg.mxu0
    %v422 = vadd.f32 %v258, %v419
    %v423 = vmul.f32 %v422, %v278
    %v424 = vtanh.pop %v423
    %v425 = vmul.f32 %v424, %v278
    %v426 = vadd.f32 %v425, %v279
    %v427 = vmul.f32 %v426, %v323
    %429 = vrot.lane.b32.xlu0 %v426, 64
    %v430 = vpop.permute.xlu0 %429
    %v432 = vmul.f32 %v426, %v430
    %434 = vrot.lane.b32.xlu0 %v432, 32
    %v435 = vpop.permute.xlu0 %434
    %v437 = vadd.f32 %v427, %v435
    %v438 = vtanh.pop %v437
    %440 = vrot.lane.b32.xlu0 %v438, 64
    %v441 = vpop.permute.xlu0 %440
    %v443 = vmul.f32 %v426, %v441
    %v444 = vpack.c.bf16 %v443, %v443
    %v445 = vpack.c.bf16 %v408, %v408
    %447 = vrot.lane.b32.xlu0 %v445, 32
    %v448 = vpop.permute.xlu0 %447
    %v450 = vsel %vm233, %v448, 0
    %452 = vmatpush.bf16.msra.mxu0 0
    %453 = vmatpush.bf16.msra.mxu0 0
    %454 = vmatpush.bf16.msra.mxu0 0
    %455 = vmatpush.bf16.msra.mxu0 0
    %456 = vmatpush.bf16.msra.mxu0 0
    %457 = vmatpush.bf16.msra.mxu0 0
    %458 = vmatpush.bf16.msra.mxu0 %v340
    %459 = vmatpush.bf16.msra.mxu0 %v339
    %460 = vmatmul.bf16.gmra.mxu0 %v450
    %v461 = vpop.f32.mrf.mxu0
    %v462 = vadd.f32 0.0, %v461
    %v463 = vpop.f32.mrf.mxu0
    %464 = vdwg.mxu0
    %466 = vrot.lane.b32.xlu0 %v444, 32
    %v467 = vpop.permute.xlu0 %466
    %v469 = vsel %vm233, %v467, 0
    %471 = vmatpush.bf16.msra.mxu0 0
    %472 = vmatpush.bf16.msra.mxu0 0
    %473 = vmatpush.bf16.msra.mxu0 0
    %474 = vmatpush.bf16.msra.mxu0 0
    %475 = vmatpush.bf16.msra.mxu0 0
    %476 = vmatpush.bf16.msra.mxu0 0
    %477 = vmatpush.bf16.msra.mxu0 %v368
    %478 = vmatpush.bf16.msra.mxu0 %v367
    %479 = vmatmul.bf16.gmra.mxu0 %v469
    %v480 = vpop.f32.mrf.mxu0
    %v481 = vadd.f32 %v462, %v480
    %v482 = vpop.f32.mrf.mxu0
    %483 = vdwg.mxu0
    %v484 = vadd.f32 %v481, %v56
    %v485 = vmul.f32 %v484, %v278
    %v486 = vtanh.pop %v485
    %v487 = vmul.f32 %v486, %v278
    %v488 = vadd.f32 %v487, %v279
    %v489 = vmul.f32 %v488, %v402
    %491 = vrot.lane.b32.xlu0 %v488, 64
    %v492 = vpop.permute.xlu0 %491
    %v494 = vmul.f32 %v488, %v492
    %496 = vrot.lane.b32.xlu0 %v494, 32
    %v497 = vpop.permute.xlu0 %496
    %v499 = vadd.f32 %v489, %v497
    %v500 = vtanh.pop %v499
    %502 = vrot.lane.b32.xlu0 %v500, 64
    %v503 = vpop.permute.xlu0 %502
    %v505 = vmul.f32 %v488, %v503
    %506 = vmatpush.bf16.msra.mxu0 0
    %507 = vmatpush.bf16.msra.mxu0 0
    %508 = vmatpush.bf16.msra.mxu0 0
    %509 = vmatpush.bf16.msra.mxu0 0
    %510 = vmatpush.bf16.msra.mxu0 0
    %511 = vmatpush.bf16.msra.mxu0 0
    %512 = vmatpush.bf16.msra.mxu0 %v289
    %513 = vmatpush.bf16.msra.mxu0 %v288
    %514 = vmatmul.bf16.gmra.mxu0 %v469
    %v515 = vpop.f32.mrf.mxu0
    %v516 = vadd.f32 0.0, %v515
    %v517 = vpop.f32.mrf.mxu0
    %518 = vdwg.mxu0
    %v519 = vadd.f32 %v261, %v516
    %v520 = vmul.f32 %v519, %v278
    %v521 = vtanh.pop %v520
    %v522 = vmul.f32 %v521, %v278
    %v523 = vadd.f32 %v522, %v279
    %v524 = vmul.f32 %v523, %v437
    %526 = vrot.lane.b32.xlu0 %v523, 64
    %v527 = vpop.permute.xlu0 %526
    %v529 = vmul.f32 %v523, %v527
    %531 = vrot.lane.b32.xlu0 %v529, 32
    %v532 = vpop.permute.xlu0 %531
    %v534 = vadd.f32 %v524, %v532
    %v535 = vtanh.pop %v534
    %537 = vrot.lane.b32.xlu0 %v535, 64
    %v538 = vpop.permute.xlu0 %537
    %v540 = vmul.f32 %v523, %v538
    %v541 = vpack.c.bf16 %v540, %v540
    %v542 = vpack.c.bf16 %v505, %v505
    %544 = vrot.lane.b32.xlu0 %v542, 32
    %v545 = vpop.permute.xlu0 %544
    %v547 = vsel %vm233, %v545, 0
    %549 = vmatpush.bf16.msra.mxu0 0
    %550 = vmatpush.bf16.msra.mxu0 0
    %551 = vmatpush.bf16.msra.mxu0 0
    %552 = vmatpush.bf16.msra.mxu0 0
    %553 = vmatpush.bf16.msra.mxu0 0
    %554 = vmatpush.bf16.msra.mxu0 0
    %555 = vmatpush.bf16.msra.mxu0 %v340
    %556 = vmatpush.bf16.msra.mxu0 %v339
    %557 = vmatmul.bf16.gmra.mxu0 %v547
    %v558 = vpop.f32.mrf.mxu0
    %v559 = vadd.f32 0.0, %v558
    %v560 = vpop.f32.mrf.mxu0
    %561 = vdwg.mxu0
    %563 = vrot.lane.b32.xlu0 %v541, 32
    %v564 = vpop.permute.xlu0 %563
    %v566 = vsel %vm233, %v564, 0
    %568 = vmatpush.bf16.msra.mxu0 0
    %569 = vmatpush.bf16.msra.mxu0 0
    %570 = vmatpush.bf16.msra.mxu0 0
    %571 = vmatpush.bf16.msra.mxu0 0
    %572 = vmatpush.bf16.msra.mxu0 0
    %573 = vmatpush.bf16.msra.mxu0 0
    %574 = vmatpush.bf16.msra.mxu0 %v368
    %575 = vmatpush.bf16.msra.mxu0 %v367
    %576 = vmatmul.bf16.gmra.mxu0 %v566
    %v577 = vpop.f32.mrf.mxu0
    %v578 = vadd.f32 %v559, %v577
    %v579 = vpop.f32.mrf.mxu0
    %580 = vdwg.mxu0
    %v581 = vadd.f32 %v578, %v56
    %v582 = vmul.f32 %v581, %v278
    %v583 = vtanh.pop %v582
    %v584 = vmul.f32 %v583, %v278
    %v585 = vadd.f32 %v584, %v279
    %v586 = vmul.f32 %v585, %v499
    %588 = vrot.lane.b32.xlu0 %v585, 64
    %v589 = vpop.permute.xlu0 %588
    %v591 = vmul.f32 %v585, %v589
    %593 = vrot.lane.b32.xlu0 %v591, 32
    %v594 = vpop.permute.xlu0 %593
    %v596 = vadd.f32 %v586, %v594
    %v597 = vtanh.pop %v596
    %599 = vrot.lane.b32.xlu0 %v597, 64
    %v600 = vpop.permute.xlu0 %599
    %v602 = vmul.f32 %v585, %v600
    %603 = vmatpush.bf16.msra.mxu0 0
    %604 = vmatpush.bf16.msra.mxu0 0
    %605 = vmatpush.bf16.msra.mxu0 0
    %606 = vmatpush.bf16.msra.mxu0 0
    %607 = vmatpush.bf16.msra.mxu0 0
    %608 = vmatpush.bf16.msra.mxu0 0
    %609 = vmatpush.bf16.msra.mxu0 %v289
    %610 = vmatpush.bf16.msra.mxu0 %v288
    %611 = vmatmul.bf16.gmra.mxu0 %v566
    %v612 = vpop.f32.mrf.mxu0
    %v613 = vadd.f32 0.0, %v612
    %v614 = vpop.f32.mrf.mxu0
    %615 = vdwg.mxu0
    %v616 = vadd.f32 %v263, %v613
    %v617 = vmul.f32 %v616, %v278
    %v618 = vtanh.pop %v617
    %v619 = vmul.f32 %v618, %v278
    %v620 = vadd.f32 %v619, %v279
    %v621 = vmul.f32 %v620, %v534
    %623 = vrot.lane.b32.xlu0 %v620, 64
    %v624 = vpop.permute.xlu0 %623
    %v626 = vmul.f32 %v620, %v624
    %628 = vrot.lane.b32.xlu0 %v626, 32
    %v629 = vpop.permute.xlu0 %628
    %v631 = vadd.f32 %v621, %v629
    %v632 = vtanh.pop %v631
    %634 = vrot.lane.b32.xlu0 %v632, 64
    %v635 = vpop.permute.xlu0 %634
    %v637 = vmul.f32 %v620, %v635
    %v638 = vpack.c.bf16 %v637, %v637
    %v639 = vpack.c.bf16 %v602, %v602
    %641 = vrot.lane.b32.xlu0 %v639, 32
    %v642 = vpop.permute.xlu0 %641
    %v644 = vsel %vm233, %v642, 0
    %646 = vmatpush.bf16.msra.mxu0 0
    %647 = vmatpush.bf16.msra.mxu0 0
    %648 = vmatpush.bf16.msra.mxu0 0
    %649 = vmatpush.bf16.msra.mxu0 0
    %650 = vmatpush.bf16.msra.mxu0 0
    %651 = vmatpush.bf16.msra.mxu0 0
    %652 = vmatpush.bf16.msra.mxu0 %v340
    %653 = vmatpush.bf16.msra.mxu0 %v339
    %654 = vmatmul.bf16.gmra.mxu0 %v644
    %v655 = vpop.f32.mrf.mxu0
    %v656 = vadd.f32 0.0, %v655
    %v657 = vpop.f32.mrf.mxu0
    %658 = vdwg.mxu0
    %660 = vrot.lane.b32.xlu0 %v638, 32
    %v661 = vpop.permute.xlu0 %660
    %v663 = vsel %vm233, %v661, 0
    %665 = vmatpush.bf16.msra.mxu0 0
    %666 = vmatpush.bf16.msra.mxu0 0
    %667 = vmatpush.bf16.msra.mxu0 0
    %668 = vmatpush.bf16.msra.mxu0 0
    %669 = vmatpush.bf16.msra.mxu0 0
    %670 = vmatpush.bf16.msra.mxu0 0
    %671 = vmatpush.bf16.msra.mxu0 %v368
    %672 = vmatpush.bf16.msra.mxu0 %v367
    %673 = vmatmul.bf16.gmra.mxu0 %v663
    %v674 = vpop.f32.mrf.mxu0
    %v675 = vadd.f32 %v656, %v674
    %v676 = vpop.f32.mrf.mxu0
    %677 = vdwg.mxu0
    %v678 = vadd.f32 %v675, %v56
    %v679 = vmul.f32 %v678, %v278
    %v680 = vtanh.pop %v679
    %v681 = vmul.f32 %v680, %v278
    %v682 = vadd.f32 %v681, %v279
    %v683 = vmul.f32 %v682, %v596
    %685 = vrot.lane.b32.xlu0 %v682, 64
    %v686 = vpop.permute.xlu0 %685
    %v688 = vmul.f32 %v682, %v686
    %690 = vrot.lane.b32.xlu0 %v688, 32
    %v691 = vpop.permute.xlu0 %690
    %v693 = vadd.f32 %v683, %v691
    %v694 = vtanh.pop %v693
    %696 = vrot.lane.b32.xlu0 %v694, 64
    %v697 = vpop.permute.xlu0 %696
    %v699 = vmul.f32 %v682, %v697
    %700 = vmatpush.bf16.msra.mxu0 0
    %701 = vmatpush.bf16.msra.mxu0 0
    %702 = vmatpush.bf16.msra.mxu0 0
    %703 = vmatpush.bf16.msra.mxu0 0
    %704 = vmatpush.bf16.msra.mxu0 0
    %705 = vmatpush.bf16.msra.mxu0 0
    %706 = vmatpush.bf16.msra.mxu0 %v289
    %707 = vmatpush.bf16.msra.mxu0 %v288
    %708 = vmatmul.bf16.gmra.mxu0 %v663
    %v709 = vpop.f32.mrf.mxu0
    %v710 = vadd.f32 0.0, %v709
    %v711 = vpop.f32.mrf.mxu0
    %712 = vdwg.mxu0
    %v713 = vadd.f32 %v266, %v710
    %v714 = vmul.f32 %v713, %v278
    %v715 = vtanh.pop %v714
    %v716 = vmul.f32 %v715, %v278
    %v717 = vadd.f32 %v716, %v279
    %v718 = vmul.f32 %v717, %v631
    %720 = vrot.lane.b32.xlu0 %v717, 64
    %v721 = vpop.permute.xlu0 %720
    %v723 = vmul.f32 %v717, %v721
    %725 = vrot.lane.b32.xlu0 %v723, 32
    %v726 = vpop.permute.xlu0 %725
    %v728 = vadd.f32 %v718, %v726
    %v729 = vtanh.pop %v728
    %731 = vrot.lane.b32.xlu0 %v729, 64
    %v732 = vpop.permute.xlu0 %731
    %v734 = vmul.f32 %v717, %v732
    %v735 = vpack.c.bf16 %v734, %v734
    %v736 = vpack.c.bf16 %v699, %v699
    %738 = vrot.lane.b32.xlu0 %v736, 32
    %v739 = vpop.permute.xlu0 %738
    %v741 = vsel %vm233, %v739, 0
    %743 = vmatpush.bf16.msra.mxu0 0
    %744 = vmatpush.bf16.msra.mxu0 0
    %745 = vmatpush.bf16.msra.mxu0 0
    %746 = vmatpush.bf16.msra.mxu0 0
    %747 = vmatpush.bf16.msra.mxu0 0
    %748 = vmatpush.bf16.msra.mxu0 0
    %749 = vmatpush.bf16.msra.mxu0 %v340
    %750 = vmatpush.bf16.msra.mxu0 %v339
    %751 = vmatmul.bf16.gmra.mxu0 %v741
    %v752 = vpop.f32.mrf.mxu0
    %v753 = vadd.f32 0.0, %v752
    %v754 = vpop.f32.mrf.mxu0
    %755 = vdwg.mxu0
    %757 = vrot.lane.b32.xlu0 %v735, 32
    %v758 = vpop.permute.xlu0 %757
    %v760 = vsel %vm233, %v758, 0
    %762 = vmatpush.bf16.msra.mxu0 0
    %763 = vmatpush.bf16.msra.mxu0 0
    %764 = vmatpush.bf16.msra.mxu0 0
    %765 = vmatpush.bf16.msra.mxu0 0
    %766 = vmatpush.bf16.msra.mxu0 0
    %767 = vmatpush.bf16.msra.mxu0 0
    %768 = vmatpush.bf16.msra.mxu0 %v368
    %769 = vmatpush.bf16.msra.mxu0 %v367
    %770 = vmatmul.bf16.gmra.mxu0 %v760
    %v771 = vpop.f32.mrf.mxu0
    %v772 = vadd.f32 %v753, %v771
    %v773 = vpop.f32.mrf.mxu0
    %774 = vdwg.mxu0
    %v775 = vadd.f32 %v772, %v56
    %v776 = vmul.f32 %v775, %v278
    %v777 = vtanh.pop %v776
    %v778 = vmul.f32 %v777, %v278
    %v779 = vadd.f32 %v778, %v279
    %v780 = vmul.f32 %v779, %v693
    %782 = vrot.lane.b32.xlu0 %v779, 64
    %v783 = vpop.permute.xlu0 %782
    %v785 = vmul.f32 %v779, %v783
    %787 = vrot.lane.b32.xlu0 %v785, 32
    %v788 = vpop.permute.xlu0 %787
    %v790 = vadd.f32 %v780, %v788
    %v791 = vtanh.pop %v790
    %793 = vrot.lane.b32.xlu0 %v791, 64
    %v794 = vpop.permute.xlu0 %793
    %v796 = vmul.f32 %v779, %v794
    %797 = vmatpush.bf16.msra.mxu0 0
    %798 = vmatpush.bf16.msra.mxu0 0
    %799 = vmatpush.bf16.msra.mxu0 0
    %800 = vmatpush.bf16.msra.mxu0 0
    %801 = vmatpush.bf16.msra.mxu0 0
    %802 = vmatpush.bf16.msra.mxu0 0
    %803 = vmatpush.bf16.msra.mxu0 %v289
    %804 = vmatpush.bf16.msra.mxu0 %v288
    %805 = vmatmul.bf16.gmra.mxu0 %v760
    %v806 = vpop.f32.mrf.mxu0
    %v807 = vadd.f32 0.0, %v806
    %v808 = vpop.f32.mrf.mxu0
    %809 = vdwg.mxu0
    %v810 = vadd.f32 %v268, %v807
    %v811 = vmul.f32 %v810, %v278
    %v812 = vtanh.pop %v811
    %v813 = vmul.f32 %v812, %v278
    %v814 = vadd.f32 %v813, %v279
    %v815 = vmul.f32 %v814, %v728
    %817 = vrot.lane.b32.xlu0 %v814, 64
    %v818 = vpop.permute.xlu0 %817
    %v820 = vmul.f32 %v814, %v818
    %822 = vrot.lane.b32.xlu0 %v820, 32
    %v823 = vpop.permute.xlu0 %822
    %v825 = vadd.f32 %v815, %v823
    %v826 = vtanh.pop %v825
    %828 = vrot.lane.b32.xlu0 %v826, 64
    %v829 = vpop.permute.xlu0 %828
    %v831 = vmul.f32 %v814, %v829
    %v832 = vpack.c.bf16 %v831, %v831
    %v833 = vpack.c.bf16 %v796, %v796
    %835 = vrot.lane.b32.xlu0 %v833, 32
    %v836 = vpop.permute.xlu0 %835
    %v838 = vsel %vm233, %v836, 0
    %840 = vmatpush.bf16.msra.mxu0 0
    %841 = vmatpush.bf16.msra.mxu0 0
    %842 = vmatpush.bf16.msra.mxu0 0
    %843 = vmatpush.bf16.msra.mxu0 0
    %844 = vmatpush.bf16.msra.mxu0 0
    %845 = vmatpush.bf16.msra.mxu0 0
    %846 = vmatpush.bf16.msra.mxu0 %v340
    %847 = vmatpush.bf16.msra.mxu0 %v339
    %848 = vmatmul.bf16.gmra.mxu0 %v838
    %v849 = vpop.f32.mrf.mxu0
    %v850 = vadd.f32 0.0, %v849
    %v851 = vpop.f32.mrf.mxu0
    %852 = vdwg.mxu0
    %854 = vrot.lane.b32.xlu0 %v832, 32
    %v855 = vpop.permute.xlu0 %854
    %v857 = vsel %vm233, %v855, 0
    %859 = vmatpush.bf16.msra.mxu0 0
    %860 = vmatpush.bf16.msra.mxu0 0
    %861 = vmatpush.bf16.msra.mxu0 0
    %862 = vmatpush.bf16.msra.mxu0 0
    %863 = vmatpush.bf16.msra.mxu0 0
    %864 = vmatpush.bf16.msra.mxu0 0
    %865 = vmatpush.bf16.msra.mxu0 %v368
    %866 = vmatpush.bf16.msra.mxu0 %v367
    %867 = vmatmul.bf16.gmra.mxu0 %v857
    %v868 = vpop.f32.mrf.mxu0
    %v869 = vadd.f32 %v850, %v868
    %v870 = vpop.f32.mrf.mxu0
    %871 = vdwg.mxu0
    %v872 = vadd.f32 %v869, %v56
    %v873 = vmul.f32 %v872, %v278
    %v874 = vtanh.pop %v873
    %v875 = vmul.f32 %v874, %v278
    %v876 = vadd.f32 %v875, %v279
    %v877 = vmul.f32 %v876, %v790
    %879 = vrot.lane.b32.xlu0 %v876, 64
    %v880 = vpop.permute.xlu0 %879
    %v882 = vmul.f32 %v876, %v880
    %884 = vrot.lane.b32.xlu0 %v882, 32
    %v885 = vpop.permute.xlu0 %884
    %v887 = vadd.f32 %v877, %v885
    %v888 = vtanh.pop %v887
    %890 = vrot.lane.b32.xlu0 %v888, 64
    %v891 = vpop.permute.xlu0 %890
    %v893 = vmul.f32 %v876, %v891
    %894 = vmatpush.bf16.msra.mxu0 0
    %895 = vmatpush.bf16.msra.mxu0 0
    %896 = vmatpush.bf16.msra.mxu0 0
    %897 = vmatpush.bf16.msra.mxu0 0
    %898 = vmatpush.bf16.msra.mxu0 0
    %899 = vmatpush.bf16.msra.mxu0 0
    %900 = vmatpush.bf16.msra.mxu0 %v289
    %901 = vmatpush.bf16.msra.mxu0 %v288
    %902 = vmatmul.bf16.gmra.mxu0 %v857
    %v903 = vpop.f32.mrf.mxu0
    %v904 = vadd.f32 0.0, %v903
    %v905 = vpop.f32.mrf.mxu0
    %906 = vdwg.mxu0
    %v907 = vadd.f32 %v271, %v904
    %v908 = vmul.f32 %v907, %v278
    %v909 = vtanh.pop %v908
    %v910 = vmul.f32 %v909, %v278
    %v911 = vadd.f32 %v910, %v279
    %v912 = vmul.f32 %v911, %v825
    %914 = vrot.lane.b32.xlu0 %v911, 64
    %v915 = vpop.permute.xlu0 %914
    %v917 = vmul.f32 %v911, %v915
    %919 = vrot.lane.b32.xlu0 %v917, 32
    %v920 = vpop.permute.xlu0 %919
    %v922 = vadd.f32 %v912, %v920
    %v923 = vtanh.pop %v922
    %925 = vrot.lane.b32.xlu0 %v923, 64
    %v926 = vpop.permute.xlu0 %925
    %v928 = vmul.f32 %v911, %v926
    %v929 = vpack.c.bf16 %v928, %v928
    %v930 = vpack.c.bf16 %v893, %v893
    %932 = vrot.lane.b32.xlu0 %v930, 32
    %v933 = vpop.permute.xlu0 %932
    %v935 = vsel %vm233, %v933, 0
    %937 = vmatpush.bf16.msra.mxu0 0
    %938 = vmatpush.bf16.msra.mxu0 0
    %939 = vmatpush.bf16.msra.mxu0 0
    %940 = vmatpush.bf16.msra.mxu0 0
    %941 = vmatpush.bf16.msra.mxu0 0
    %942 = vmatpush.bf16.msra.mxu0 0
    %943 = vmatpush.bf16.msra.mxu0 %v340
    %944 = vmatpush.bf16.msra.mxu0 %v339
    %945 = vmatmul.bf16.gmra.mxu0 %v935
    %v946 = vpop.f32.mrf.mxu0
    %v947 = vadd.f32 0.0, %v946
    %v948 = vpop.f32.mrf.mxu0
    %949 = vdwg.mxu0
    %951 = vrot.lane.b32.xlu0 %v929, 32
    %v952 = vpop.permute.xlu0 %951
    %v954 = vsel %vm233, %v952, 0
    %956 = vmatpush.bf16.msra.mxu0 0
    %957 = vmatpush.bf16.msra.mxu0 0
    %958 = vmatpush.bf16.msra.mxu0 0
    %959 = vmatpush.bf16.msra.mxu0 0
    %960 = vmatpush.bf16.msra.mxu0 0
    %961 = vmatpush.bf16.msra.mxu0 0
    %962 = vmatpush.bf16.msra.mxu0 %v368
    %963 = vmatpush.bf16.msra.mxu0 %v367
    %964 = vmatmul.bf16.gmra.mxu0 %v954
    %v965 = vpop.f32.mrf.mxu0
    %v966 = vadd.f32 %v947, %v965
    %v967 = vpop.f32.mrf.mxu0
    %968 = vdwg.mxu0
    %v969 = vadd.f32 %v966, %v56
    %v970 = vmul.f32 %v969, %v278
    %v971 = vtanh.pop %v970
    %v972 = vmul.f32 %v971, %v278
    %v973 = vadd.f32 %v972, %v279
    %v974 = vmul.f32 %v973, %v887
    %976 = vrot.lane.b32.xlu0 %v973, 64
    %v977 = vpop.permute.xlu0 %976
    %v979 = vmul.f32 %v973, %v977
    %981 = vrot.lane.b32.xlu0 %v979, 32
    %v982 = vpop.permute.xlu0 %981
    %v984 = vadd.f32 %v974, %v982
    %v985 = vtanh.pop %v984
    %987 = vrot.lane.b32.xlu0 %v985, 64
    %v988 = vpop.permute.xlu0 %987
    %v990 = vmul.f32 %v973, %v988
    %991 = vmatpush.bf16.msra.mxu0 0
    %992 = vmatpush.bf16.msra.mxu0 0
    %993 = vmatpush.bf16.msra.mxu0 0
    %994 = vmatpush.bf16.msra.mxu0 0
    %995 = vmatpush.bf16.msra.mxu0 0
    %996 = vmatpush.bf16.msra.mxu0 0
    %997 = vmatpush.bf16.msra.mxu0 %v289
    %998 = vmatpush.bf16.msra.mxu0 %v288
    %999 = vmatmul.bf16.gmra.mxu0 %v954
    %v1000 = vpop.f32.mrf.mxu0
    %v1001 = vadd.f32 0.0, %v1000
    %v1002 = vpop.f32.mrf.mxu0
    %1003 = vdwg.mxu0
    %v1004 = vadd.f32 %v273, %v1001
    %v1005 = vmul.f32 %v1004, %v278
    %v1006 = vtanh.pop %v1005
    %v1007 = vmul.f32 %v1006, %v278
    %v1008 = vadd.f32 %v1007, %v279
    %v1009 = vmul.f32 %v1008, %v922
    %1011 = vrot.lane.b32.xlu0 %v1008, 64
    %v1012 = vpop.permute.xlu0 %1011
    %v1014 = vmul.f32 %v1008, %v1012
    %1016 = vrot.lane.b32.xlu0 %v1014, 32
    %v1017 = vpop.permute.xlu0 %1016
    %v1019 = vadd.f32 %v1009, %v1017
    %v1020 = vtanh.pop %v1019
    %1022 = vrot.lane.b32.xlu0 %v1020, 64
    %v1023 = vpop.permute.xlu0 %1022
    %v1025 = vmul.f32 %v1008, %v1023
    %v1026 = vpack.c.bf16 %v1025, %v1025
    %v1027 = vpack.c.bf16 %v990, %v990
    %1029 = vrot.lane.b32.xlu0 %v1027, 32
    %v1030 = vpop.permute.xlu0 %1029
    %v1032 = vsel %vm233, %v1030, 0
    %1034 = vmatpush.bf16.msra.mxu0 0
    %1035 = vmatpush.bf16.msra.mxu0 0
    %1036 = vmatpush.bf16.msra.mxu0 0
    %1037 = vmatpush.bf16.msra.mxu0 0
    %1038 = vmatpush.bf16.msra.mxu0 0
    %1039 = vmatpush.bf16.msra.mxu0 0
    %1040 = vmatpush.bf16.msra.mxu0 %v340
    %1041 = vmatpush.bf16.msra.mxu0 %v339
    %1042 = vmatmul.bf16.gmra.mxu0 %v1032
    %v1043 = vpop.f32.mrf.mxu0
    %v1044 = vadd.f32 0.0, %v1043
    %v1045 = vpop.f32.mrf.mxu0
    %1046 = vdwg.mxu0
    %1048 = vrot.lane.b32.xlu0 %v1026, 32
    %v1049 = vpop.permute.xlu0 %1048
    %v1051 = vsel %vm233, %v1049, 0
    %1053 = vmatpush.bf16.msra.mxu0 0
    %1054 = vmatpush.bf16.msra.mxu0 0
    %1055 = vmatpush.bf16.msra.mxu0 0
    %1056 = vmatpush.bf16.msra.mxu0 0
    %1057 = vmatpush.bf16.msra.mxu0 0
    %1058 = vmatpush.bf16.msra.mxu0 0
    %1059 = vmatpush.bf16.msra.mxu0 %v368
    %1060 = vmatpush.bf16.msra.mxu0 %v367
    %1061 = vmatmul.bf16.gmra.mxu0 %v1051
    %v1062 = vpop.f32.mrf.mxu0
    %v1063 = vadd.f32 %v1044, %v1062
    %v1064 = vpop.f32.mrf.mxu0
    %1065 = vdwg.mxu0
    %v1066 = vadd.f32 %v1063, %v56
    %v1067 = vmul.f32 %v1066, %v278
    %v1068 = vtanh.pop %v1067
    %v1069 = vmul.f32 %v1068, %v278
    %v1070 = vadd.f32 %v1069, %v279
    %v1071 = vmul.f32 %v1070, %v984
    %1073 = vrot.lane.b32.xlu0 %v1070, 64
    %v1074 = vpop.permute.xlu0 %1073
    %v1076 = vmul.f32 %v1070, %v1074
    %1078 = vrot.lane.b32.xlu0 %v1076, 32
    %v1079 = vpop.permute.xlu0 %1078
    %v1081 = vadd.f32 %v1071, %v1079
    %v1082 = vtanh.pop %v1081
    %1084 = vrot.lane.b32.xlu0 %v1082, 64
    %v1085 = vpop.permute.xlu0 %1084
    %v1087 = vmul.f32 %v1070, %v1085
    %1089 = vrot.lane.b32.xlu0 %v1025, 32
    %v1090 = vpop.permute.xlu0 %1089
    %1093 = vrot.lane.b32.xlu0 %v1087, 96
    %v1094 = vpop.permute.xlu0 %1093
    %1097 = vrot.lane.b32.xlu0 %v1081, 64
    %v1098 = vpop.permute.xlu0 %1097
    %v1100 = vsel %vm233, %v1090, %v1019
    %vm1101 = vcmask 523264
    %v1102 = vsel %vm1101, %v1100, %v1094
    %vm1103 = vcmask 785408
    %v1104 = vsel %vm1103, %v1102, %v1098
    %v1105 = vtanh.pop %v1104
    %v1106 = vpack.c.bf16 %v1105, %v1105
    %v1108 = vperm.slane %v74, 0
    %v1126 = vunpack.c.l.b16 %v58
    %v1127 = vunpack.c.l.b16 %v59
    %v1128 = vunpack.c.l.b16 %v60
    %v1129 = vunpack.c.l.b16 %v61
    %v1130 = vunpack.c.l.b16 %v62
    %v1131 = vunpack.c.l.b16 %v63
    %v1132 = vunpack.c.l.b16 %v64
    %v1133 = vunpack.c.l.b16 %v65
    %v1134 = vunpack.c.l.b16 %v66
    %v1135 = vunpack.c.l.b16 %v67
    %v1136 = vunpack.c.l.b16 %v68
    %v1137 = vunpack.c.l.b16 %v69
    %v1138 = vunpack.c.l.b16 %v70
    %v1139 = vunpack.c.l.b16 %v71
    %v1140 = vunpack.c.l.b16 %v72
    %v1141 = vunpack.c.l.b16 %v73
    %v1142 = vpack.c.b16 %v1127, %v1126
    %v1143 = vpack.c.b16 %v1129, %v1128
    %v1144 = vpack.c.b16 %v1131, %v1130
    %v1145 = vpack.c.b16 %v1133, %v1132
    %v1146 = vpack.c.b16 %v1135, %v1134
    %v1147 = vpack.c.b16 %v1137, %v1136
    %v1148 = vpack.c.b16 %v1139, %v1138
    %v1149 = vpack.c.b16 %v1141, %v1140
    %1158 = vmatpush.bf16.msra.mxu0 %v1149
    %1159 = vmatpush.bf16.msra.mxu0 %v1148
    %1160 = vmatpush.bf16.msra.mxu0 %v1147
    %1161 = vmatpush.bf16.msra.mxu0 %v1146
    %1162 = vmatpush.bf16.msra.mxu0 %v1145
    %1163 = vmatpush.bf16.msra.mxu0 %v1144
    %1164 = vmatpush.bf16.msra.mxu0 %v1143
    %1165 = vmatpush.bf16.msra.mxu0 %v1142
    %1166 = vmatmul.bf16.gmra.mxu0 %v1106
    %v1167 = vpop.f32.mrf.mxu0
    %v1168 = vadd.f32 %v1108, %v1167
    %v1169 = vpop.f32.mrf.mxu0
    %1170 = vdwg.mxu0
    %vm1171 = vcmask 254976
    %1172 = vst.msk [vmem:[#allocation2] sm:$0x3] %vm1171, %v1168
    // Predicated region
    $region42: #{tpu_custom_call.1} parent=1 // pred_check
      _
    $region43: #{tpu_custom_call.1} parent=1 // pred_check_branch
      %1174 = sbr.rel (0) target = $region45
    $region44: #{tpu_custom_call.1} parent=1 // pred_region
      %1176 = vsyncadd [#allocation3], 0
      %s1178 = sshll.u32 [#allocation2], 4
      %s1179 = int_to_ptr.vmem [resolvable:$true] %s1178
      %s1180 = sshll.u32 %s10, 4
      %s1181 = int_to_ptr.hbm [resolvable:$true] %s1180
      %1183 = dma.vmem_to_hbm [thread:$0]  %s1179, 32, %s1181, [#allocation3]
    $region45: #{tpu_custom_call.1} parent=1 // pred_fallthru
      _
    // Predicated region
    $region46: #{tpu_custom_call.1} parent=1 // pred_check
      _
    $region47: #{tpu_custom_call.1} parent=1 // pred_check_branch
      %1185 = sbr.rel (0) target = $region49
    $region48: #{tpu_custom_call.1} parent=1 // pred_region
      %1187 = dma.done [#allocation3], 32
    $region49: #{tpu_custom_call.1} parent=1 // pred_fallthru
      _
    %1188 = vsyncpa [#allocation3], 1

</llo_original>
